<compile_context>
chip_gen: v5e
topology: v5e:2x2
jax: 0.10.0
libtpu: 0.0.40
codegen_flags: <defaults>
</compile_context>

<pallas_src>
import jax
import jax.numpy as jnp
from jax.experimental import pallas as pl
from jax.experimental.pallas import tpu as pltpu

# ----- static problem config (torch.nn.Conv2d(8, 16, 5, stride=1, padding=1)) -----
CIN = 8
COUT = 16
KH = KW = 5
PAD = 1
STRIDE = 1
NEG_SLOPE = 0.2  # the module uses v1 * 0.2 explicitly (not LeakyReLU's default 0.01)


def _make_conv_leaky_kernel(B, H, W):
    HP, WP = H + 2 * PAD, W + 2 * PAD
    HOUT = (H + 2 * PAD - KH) // STRIDE + 1
    WOUT = (W + 2 * PAD - KW) // STRIDE + 1
    M_OVER = HOUT * WP                   # overwide columns per image (row stride = WP)
    K = KH * KW * CIN                    # 200
    XP_LEN = HP * WP + (KW - 1)          # tail pad so every slab slice stays in-bounds

    def kernel(x_ref, w_ref, b_ref, o_ref, xp_ref, p_ref):
        # x_ref : (B, CIN, H*W)        NCHW input, spatial flattened (lane-dense)
        # w_ref : (COUT, K)            weights, k-order (kh, kw, ci)
        # b_ref : (COUT, 1)
        # o_ref : (B, COUT, HOUT*WOUT) lane-dense output
        # xp_ref: (CIN, XP_LEN)        flat zero-padded image (reused for each b)
        # p_ref : (K, B*M_OVER)        transposed im2col patch matrix (overwide cols)

        # Lane-dense scratch -> clearing the whole buffer is only a few vector
        # stores; re-done every step so it is correct when the grid is sharded
        # across cores (scratch is per-core).
        xp_ref[...] = jnp.zeros_like(xp_ref)

        for b in range(B):
            # Zero padding folded in: copy each input row into the padded interior.
            for r in range(H):
                xp_ref[:, pl.ds((r + PAD) * WP + PAD, W)] = x_ref[b, :, pl.ds(r * W, W)]

            # Transposed im2col: for each (kh, kw) the whole (CIN, M_OVER) slab is a
            # single contiguous lane slice of the flat padded image (no reshape, no
            # relayout), written as an 8-sublane, full-width row block of p_ref.
            for kh in range(KH):
                for kw in range(KW):
                    base = (kh * KW + kw) * CIN
                    p_ref[pl.ds(base, CIN), pl.ds(b * M_OVER, M_OVER)] = (
                        xp_ref[:, pl.ds(kh * WP + kw, M_OVER)]
                    )

        # Single MXU matmul: (COUT, K) @ (K, B*M_OVER), f32 accumulation.
        acc = jnp.dot(w_ref[...], p_ref[...], preferred_element_type=jnp.float32)
        acc = acc + b_ref[...]                       # bias broadcast over columns
        acc = jnp.where(acc > 0, acc, acc * NEG_SLOPE)

        # Compact the overwide (stride-WP) columns down to the WOUT valid ones per
        # output row; stored lane-dense as (COUT, HOUT*WOUT) per image, no transpose.
        for b in range(B):
            for oh in range(HOUT):
                src = b * M_OVER + oh * WP
                o_ref[b, :, pl.ds(oh * WOUT, WOUT)] = acc[:, src:src + WOUT]

    return kernel, HOUT, WOUT, M_OVER, K, XP_LEN


def _pick_images_per_step(n):
    if n <= 2:
        return 1
    # Batch images per grid step (amortize the ~0.35us/step overhead on the
    # single-TC v5e/v6e) while keeping >= 2 steps so both v7x TensorCores get work.
    b = min(8, max(1, n // 2))
    while n % b:
        b -= 1
    return b


def conv_leaky_forward(x_nchw, weight_oihw, bias, *, images_per_step=None):
    """x_nchw: (N, 8, H, W) float32 -> (N, 16, Hout, Wout) float32."""
    n, cin, h, w = x_nchw.shape
    assert cin == CIN
    B = _pick_images_per_step(n) if images_per_step is None else images_per_step
    assert n % B == 0
    grid = (n // B,)

    kernel, hout, wout, m_over, k_dim, xp_len = _make_conv_leaky_kernel(B, h, w)

    # Free contiguous reshapes / tiny host-side prep; no NCHW->NHWC transpose pass.
    x_flat = x_nchw.reshape(n, CIN, h * w)
    # k-order (kh, kw, ci) matches the im2col row order used in the kernel.
    w_mat = jnp.transpose(weight_oihw, (0, 2, 3, 1)).reshape(COUT, k_dim)
    b_col = bias.reshape(COUT, 1)

    out_flat = pl.pallas_call(
        kernel,
        out_shape=jax.ShapeDtypeStruct((n, COUT, hout * wout), jnp.float32),
        grid_spec=pltpu.PrefetchScalarGridSpec(
            num_scalar_prefetch=0,
            grid=grid,
            in_specs=[
                pl.BlockSpec((B, CIN, h * w), lambda i: (i, 0, 0)),
                pl.BlockSpec((COUT, k_dim), lambda i: (0, 0)),
                pl.BlockSpec((COUT, 1), lambda i: (0, 0)),
            ],
            out_specs=pl.BlockSpec((B, COUT, hout * wout), lambda i: (i, 0, 0)),
            scratch_shapes=[
                pltpu.VMEM((CIN, xp_len), jnp.float32),
                pltpu.VMEM((k_dim, B * m_over), jnp.float32),
            ],
        ),
        compiler_params=pltpu.CompilerParams(
            dimension_semantics=("parallel",),   # batch sharded over TCs on v7x
        ),
    )(x_flat, w_mat, b_col)

    # (N, COUT, HOUT*WOUT) -> (N, COUT, HOUT, WOUT): pure row-major reshape (free).
    return out_flat.reshape(n, COUT, hout, wout)


def _reference(x_nchw, weight_oihw, bias):
    """Pure-JAX reference (lax conv) for correctness check."""
    v1 = jax.lax.conv_general_dilated(
        x_nchw, weight_oihw,
        window_strides=(STRIDE, STRIDE),
        padding=((PAD, PAD), (PAD, PAD)),
        dimension_numbers=("NCHW", "OIHW", "NCHW"),
    ) + bias.reshape(1, COUT, 1, 1)
    return jnp.where(v1 > 0, v1, v1 * NEG_SLOPE)


if __name__ == "__main__":
    key = jax.random.PRNGKey(0)
    kx, kwt, kb = jax.random.split(key, 3)

    # Deterministic synthetic parameters (shapes from the module's __init__).
    fan_in = CIN * KH * KW
    bound = 1.0 / (fan_in ** 0.5)
    weight = jax.random.uniform(kwt, (COUT, CIN, KH, KW), jnp.float32, -bound, bound)
    bias = jax.random.uniform(kb, (COUT,), jnp.float32, -bound, bound)

    # Small input consistent with the module: N=2, C=8, H=W=16.
    x = jax.random.normal(kx, (2, CIN, 16, 16), jnp.float32)

    out = jax.jit(conv_leaky_forward)(x, weight, bias)
    out = jax.block_until_ready(out)

    ref = _reference(x, weight, bias)
    assert out.shape == ref.shape == (2, COUT, 14, 14), out.shape
    err = float(jnp.max(jnp.abs(out - ref)))
    assert jnp.allclose(out, ref, atol=2e-4, rtol=2e-4), err

    print("KERNEL_OK")
</pallas_src>

<mosaic_0001>
module attributes {stable_mosaic.version = 11 : i64} {
  func.func @kernel(%arg0: i32, %arg1: memref<1x8x256xf32, #tpu.memory_space<vmem>>, %arg2: memref<16x200xf32, #tpu.memory_space<vmem>>, %arg3: memref<16x1xf32, #tpu.memory_space<vmem>>, %arg4: memref<1x16x196xf32, #tpu.memory_space<vmem>>, %arg5: memref<8x328xf32, #tpu.memory_space<vmem>>, %arg6: memref<200x252xf32, #tpu.memory_space<vmem>>) attributes {dimension_semantics = [#tpu.dimension_semantics<parallel>], iteration_bounds = array<i64: 2>, scalar_prefetch = 0 : i64, scratch_operands = 2 : i64, tpu.core_type = #tpu.core_type<tc>, window_params = [{transform_indices = @transform_0, window_bounds = array<i64: 1, 8, 256>}, {pipeline_mode = #tpu.pipeline_mode<synchronous>, transform_indices = @transform_1, window_bounds = array<i64: 16, 200>}, {pipeline_mode = #tpu.pipeline_mode<synchronous>, transform_indices = @transform_2, window_bounds = array<i64: 16, 1>}, {transform_indices = @transform_3, window_bounds = array<i64: 1, 16, 196>}]} {
    %cst = arith.constant 0.000000e+00 : f32
    %0 = vector.broadcast %cst : f32 to vector<8x328xf32>
    %c0 = arith.constant 0 : index
    %c0_0 = arith.constant 0 : index
    %1 = vector.load %arg5[%c0, %c0_0] : memref<8x328xf32, #tpu.memory_space<vmem>>, vector<8x328xf32>
    tpu.vector_store %arg5[%c0, %c0_0], %0 {strides = array<i32>} : memref<8x328xf32, #tpu.memory_space<vmem>>, vector<8x328xf32>,
    %c0_1 = arith.constant 0 : index
    %c0_2 = arith.constant 0 : index
    %c0_3 = arith.constant 0 : index
    %2 = vector.load %arg1[%c0_1, %c0_2, %c0_3] : memref<1x8x256xf32, #tpu.memory_space<vmem>>, vector<1x8x16xf32>
    %3 = vector.shape_cast %2 : vector<1x8x16xf32> to vector<8x16xf32>
    %c0_4 = arith.constant 0 : index
    %c19 = arith.constant 19 : index
    %4 = vector.load %arg5[%c0_4, %c19] : memref<8x328xf32, #tpu.memory_space<vmem>>, vector<8x16xf32>
    tpu.vector_store %arg5[%c0_4, %c19], %3 {strides = array<i32>} : memref<8x328xf32, #tpu.memory_space<vmem>>, vector<8x16xf32>,
    %c0_5 = arith.constant 0 : index
    %c0_6 = arith.constant 0 : index
    %c16 = arith.constant 16 : index
    %5 = vector.load %arg1[%c0_5, %c0_6, %c16] : memref<1x8x256xf32, #tpu.memory_space<vmem>>, vector<1x8x16xf32>
    %6 = vector.shape_cast %5 : vector<1x8x16xf32> to vector<8x16xf32>
    %c0_7 = arith.constant 0 : index
    %c37 = arith.constant 37 : index
    %7 = vector.load %arg5[%c0_7, %c37] : memref<8x328xf32, #tpu.memory_space<vmem>>, vector<8x16xf32>
    tpu.vector_store %arg5[%c0_7, %c37], %6 {strides = array<i32>} : memref<8x328xf32, #tpu.memory_space<vmem>>, vector<8x16xf32>,
    %c0_8 = arith.constant 0 : index
    %c0_9 = arith.constant 0 : index
    %c32 = arith.constant 32 : index
    %8 = vector.load %arg1[%c0_8, %c0_9, %c32] : memref<1x8x256xf32, #tpu.memory_space<vmem>>, vector<1x8x16xf32>
    %9 = vector.shape_cast %8 : vector<1x8x16xf32> to vector<8x16xf32>
    %c0_10 = arith.constant 0 : index
    %c55 = arith.constant 55 : index
    %10 = vector.load %arg5[%c0_10, %c55] : memref<8x328xf32, #tpu.memory_space<vmem>>, vector<8x16xf32>
    tpu.vector_store %arg5[%c0_10, %c55], %9 {strides = array<i32>} : memref<8x328xf32, #tpu.memory_space<vmem>>, vector<8x16xf32>,
    %c0_11 = arith.constant 0 : index
    %c0_12 = arith.constant 0 : index
    %c48 = arith.constant 48 : index
    %11 = vector.load %arg1[%c0_11, %c0_12, %c48] : memref<1x8x256xf32, #tpu.memory_space<vmem>>, vector<1x8x16xf32>
    %12 = vector.shape_cast %11 : vector<1x8x16xf32> to vector<8x16xf32>
    %c0_13 = arith.constant 0 : index
    %c73 = arith.constant 73 : index
    %13 = vector.load %arg5[%c0_13, %c73] : memref<8x328xf32, #tpu.memory_space<vmem>>, vector<8x16xf32>
    tpu.vector_store %arg5[%c0_13, %c73], %12 {strides = array<i32>} : memref<8x328xf32, #tpu.memory_space<vmem>>, vector<8x16xf32>,
    %c0_14 = arith.constant 0 : index
    %c0_15 = arith.constant 0 : index
    %c64 = arith.constant 64 : index
    %14 = vector.load %arg1[%c0_14, %c0_15, %c64] : memref<1x8x256xf32, #tpu.memory_space<vmem>>, vector<1x8x16xf32>
    %15 = vector.shape_cast %14 : vector<1x8x16xf32> to vector<8x16xf32>
    %c0_16 = arith.constant 0 : index
    %c91 = arith.constant 91 : index
    %16 = vector.load %arg5[%c0_16, %c91] : memref<8x328xf32, #tpu.memory_space<vmem>>, vector<8x16xf32>
    tpu.vector_store %arg5[%c0_16, %c91], %15 {strides = array<i32>} : memref<8x328xf32, #tpu.memory_space<vmem>>, vector<8x16xf32>,
    %c0_17 = arith.constant 0 : index
    %c0_18 = arith.constant 0 : index
    %c80 = arith.constant 80 : index
    %17 = vector.load %arg1[%c0_17, %c0_18, %c80] : memref<1x8x256xf32, #tpu.memory_space<vmem>>, vector<1x8x16xf32>
    %18 = vector.shape_cast %17 : vector<1x8x16xf32> to vector<8x16xf32>
    %c0_19 = arith.constant 0 : index
    %c109 = arith.constant 109 : index
    %19 = vector.load %arg5[%c0_19, %c109] : memref<8x328xf32, #tpu.memory_space<vmem>>, vector<8x16xf32>
    tpu.vector_store %arg5[%c0_19, %c109], %18 {strides = array<i32>} : memref<8x328xf32, #tpu.memory_space<vmem>>, vector<8x16xf32>,
    %c0_20 = arith.constant 0 : index
    %c0_21 = arith.constant 0 : index
    %c96 = arith.constant 96 : index
    %20 = vector.load %arg1[%c0_20, %c0_21, %c96] : memref<1x8x256xf32, #tpu.memory_space<vmem>>, vector<1x8x16xf32>
    %21 = vector.shape_cast %20 : vector<1x8x16xf32> to vector<8x16xf32>
    %c0_22 = arith.constant 0 : index
    %c127 = arith.constant 127 : index
    %22 = vector.load %arg5[%c0_22, %c127] : memref<8x328xf32, #tpu.memory_space<vmem>>, vector<8x16xf32>
    tpu.vector_store %arg5[%c0_22, %c127], %21 {strides = array<i32>} : memref<8x328xf32, #tpu.memory_space<vmem>>, vector<8x16xf32>,
    %c0_23 = arith.constant 0 : index
    %c0_24 = arith.constant 0 : index
    %c112 = arith.constant 112 : index
    %23 = vector.load %arg1[%c0_23, %c0_24, %c112] : memref<1x8x256xf32, #tpu.memory_space<vmem>>, vector<1x8x16xf32>
    %24 = vector.shape_cast %23 : vector<1x8x16xf32> to vector<8x16xf32>
    %c0_25 = arith.constant 0 : index
    %c145 = arith.constant 145 : index
    %25 = vector.load %arg5[%c0_25, %c145] : memref<8x328xf32, #tpu.memory_space<vmem>>, vector<8x16xf32>
    tpu.vector_store %arg5[%c0_25, %c145], %24 {strides = array<i32>} : memref<8x328xf32, #tpu.memory_space<vmem>>, vector<8x16xf32>,
    %c0_26 = arith.constant 0 : index
    %c0_27 = arith.constant 0 : index
    %c128 = arith.constant 128 : index
    %26 = vector.load %arg1[%c0_26, %c0_27, %c128] : memref<1x8x256xf32, #tpu.memory_space<vmem>>, vector<1x8x16xf32>
    %27 = vector.shape_cast %26 : vector<1x8x16xf32> to vector<8x16xf32>
    %c0_28 = arith.constant 0 : index
    %c163 = arith.constant 163 : index
    %28 = vector.load %arg5[%c0_28, %c163] : memref<8x328xf32, #tpu.memory_space<vmem>>, vector<8x16xf32>
    tpu.vector_store %arg5[%c0_28, %c163], %27 {strides = array<i32>} : memref<8x328xf32, #tpu.memory_space<vmem>>, vector<8x16xf32>,
    %c0_29 = arith.constant 0 : index
    %c0_30 = arith.constant 0 : index
    %c144 = arith.constant 144 : index
    %29 = vector.load %arg1[%c0_29, %c0_30, %c144] : memref<1x8x256xf32, #tpu.memory_space<vmem>>, vector<1x8x16xf32>
    %30 = vector.shape_cast %29 : vector<1x8x16xf32> to vector<8x16xf32>
    %c0_31 = arith.constant 0 : index
    %c181 = arith.constant 181 : index
    %31 = vector.load %arg5[%c0_31, %c181] : memref<8x328xf32, #tpu.memory_space<vmem>>, vector<8x16xf32>
    tpu.vector_store %arg5[%c0_31, %c181], %30 {strides = array<i32>} : memref<8x328xf32, #tpu.memory_space<vmem>>, vector<8x16xf32>,
    %c0_32 = arith.constant 0 : index
    %c0_33 = arith.constant 0 : index
    %c160 = arith.constant 160 : index
    %32 = vector.load %arg1[%c0_32, %c0_33, %c160] : memref<1x8x256xf32, #tpu.memory_space<vmem>>, vector<1x8x16xf32>
    %33 = vector.shape_cast %32 : vector<1x8x16xf32> to vector<8x16xf32>
    %c0_34 = arith.constant 0 : index
    %c199 = arith.constant 199 : index
    %34 = vector.load %arg5[%c0_34, %c199] : memref<8x328xf32, #tpu.memory_space<vmem>>, vector<8x16xf32>
    tpu.vector_store %arg5[%c0_34, %c199], %33 {strides = array<i32>} : memref<8x328xf32, #tpu.memory_space<vmem>>, vector<8x16xf32>,
    %c0_35 = arith.constant 0 : index
    %c0_36 = arith.constant 0 : index
    %c176 = arith.constant 176 : index
    %35 = vector.load %arg1[%c0_35, %c0_36, %c176] : memref<1x8x256xf32, #tpu.memory_space<vmem>>, vector<1x8x16xf32>
    %36 = vector.shape_cast %35 : vector<1x8x16xf32> to vector<8x16xf32>
    %c0_37 = arith.constant 0 : index
    %c217 = arith.constant 217 : index
    %37 = vector.load %arg5[%c0_37, %c217] : memref<8x328xf32, #tpu.memory_space<vmem>>, vector<8x16xf32>
    tpu.vector_store %arg5[%c0_37, %c217], %36 {strides = array<i32>} : memref<8x328xf32, #tpu.memory_space<vmem>>, vector<8x16xf32>,
    %c0_38 = arith.constant 0 : index
    %c0_39 = arith.constant 0 : index
    %c192 = arith.constant 192 : index
    %38 = vector.load %arg1[%c0_38, %c0_39, %c192] : memref<1x8x256xf32, #tpu.memory_space<vmem>>, vector<1x8x16xf32>
    %39 = vector.shape_cast %38 : vector<1x8x16xf32> to vector<8x16xf32>
    %c0_40 = arith.constant 0 : index
    %c235 = arith.constant 235 : index
    %40 = vector.load %arg5[%c0_40, %c235] : memref<8x328xf32, #tpu.memory_space<vmem>>, vector<8x16xf32>
    tpu.vector_store %arg5[%c0_40, %c235], %39 {strides = array<i32>} : memref<8x328xf32, #tpu.memory_space<vmem>>, vector<8x16xf32>,
    %c0_41 = arith.constant 0 : index
    %c0_42 = arith.constant 0 : index
    %c208 = arith.constant 208 : index
    %41 = vector.load %arg1[%c0_41, %c0_42, %c208] : memref<1x8x256xf32, #tpu.memory_space<vmem>>, vector<1x8x16xf32>
    %42 = vector.shape_cast %41 : vector<1x8x16xf32> to vector<8x16xf32>
    %c0_43 = arith.constant 0 : index
    %c253 = arith.constant 253 : index
    %43 = vector.load %arg5[%c0_43, %c253] : memref<8x328xf32, #tpu.memory_space<vmem>>, vector<8x16xf32>
    tpu.vector_store %arg5[%c0_43, %c253], %42 {strides = array<i32>} : memref<8x328xf32, #tpu.memory_space<vmem>>, vector<8x16xf32>,
    %c0_44 = arith.constant 0 : index
    %c0_45 = arith.constant 0 : index
    %c224 = arith.constant 224 : index
    %44 = vector.load %arg1[%c0_44, %c0_45, %c224] : memref<1x8x256xf32, #tpu.memory_space<vmem>>, vector<1x8x16xf32>
    %45 = vector.shape_cast %44 : vector<1x8x16xf32> to vector<8x16xf32>
    %c0_46 = arith.constant 0 : index
    %c271 = arith.constant 271 : index
    %46 = vector.load %arg5[%c0_46, %c271] : memref<8x328xf32, #tpu.memory_space<vmem>>, vector<8x16xf32>
    tpu.vector_store %arg5[%c0_46, %c271], %45 {strides = array<i32>} : memref<8x328xf32, #tpu.memory_space<vmem>>, vector<8x16xf32>,
    %c0_47 = arith.constant 0 : index
    %c0_48 = arith.constant 0 : index
    %c240 = arith.constant 240 : index
    %47 = vector.load %arg1[%c0_47, %c0_48, %c240] : memref<1x8x256xf32, #tpu.memory_space<vmem>>, vector<1x8x16xf32>
    %48 = vector.shape_cast %47 : vector<1x8x16xf32> to vector<8x16xf32>
    %c0_49 = arith.constant 0 : index
    %c289 = arith.constant 289 : index
    %49 = vector.load %arg5[%c0_49, %c289] : memref<8x328xf32, #tpu.memory_space<vmem>>, vector<8x16xf32>
    tpu.vector_store %arg5[%c0_49, %c289], %48 {strides = array<i32>} : memref<8x328xf32, #tpu.memory_space<vmem>>, vector<8x16xf32>,
    %c0_50 = arith.constant 0 : index
    %c0_51 = arith.constant 0 : index
    %50 = vector.load %arg5[%c0_50, %c0_51] : memref<8x328xf32, #tpu.memory_space<vmem>>, vector<8x252xf32>
    %c0_52 = arith.constant 0 : index
    %c0_53 = arith.constant 0 : index
    %51 = vector.load %arg6[%c0_52, %c0_53] : memref<200x252xf32, #tpu.memory_space<vmem>>, vector<8x252xf32>
    tpu.vector_store %arg6[%c0_52, %c0_53], %50 {strides = array<i32>} : memref<200x252xf32, #tpu.memory_space<vmem>>, vector<8x252xf32>,
    %c0_54 = arith.constant 0 : index
    %c1 = arith.constant 1 : index
    %52 = vector.load %arg5[%c0_54, %c1] : memref<8x328xf32, #tpu.memory_space<vmem>>, vector<8x252xf32>
    %c8 = arith.constant 8 : index
    %c0_55 = arith.constant 0 : index
    %53 = vector.load %arg6[%c8, %c0_55] : memref<200x252xf32, #tpu.memory_space<vmem>>, vector<8x252xf32>
    tpu.vector_store %arg6[%c8, %c0_55], %52 {strides = array<i32>} : memref<200x252xf32, #tpu.memory_space<vmem>>, vector<8x252xf32>,
    %c0_56 = arith.constant 0 : index
    %c2 = arith.constant 2 : index
    %54 = vector.load %arg5[%c0_56, %c2] : memref<8x328xf32, #tpu.memory_space<vmem>>, vector<8x252xf32>
    %c16_57 = arith.constant 16 : index
    %c0_58 = arith.constant 0 : index
    %55 = vector.load %arg6[%c16_57, %c0_58] : memref<200x252xf32, #tpu.memory_space<vmem>>, vector<8x252xf32>
    tpu.vector_store %arg6[%c16_57, %c0_58], %54 {strides = array<i32>} : memref<200x252xf32, #tpu.memory_space<vmem>>, vector<8x252xf32>,
    %c0_59 = arith.constant 0 : index
    %c3 = arith.constant 3 : index
    %56 = vector.load %arg5[%c0_59, %c3] : memref<8x328xf32, #tpu.memory_space<vmem>>, vector<8x252xf32>
    %c24 = arith.constant 24 : index
    %c0_60 = arith.constant 0 : index
    %57 = vector.load %arg6[%c24, %c0_60] : memref<200x252xf32, #tpu.memory_space<vmem>>, vector<8x252xf32>
    tpu.vector_store %arg6[%c24, %c0_60], %56 {strides = array<i32>} : memref<200x252xf32, #tpu.memory_space<vmem>>, vector<8x252xf32>,
    %c0_61 = arith.constant 0 : index
    %c4 = arith.constant 4 : index
    %58 = vector.load %arg5[%c0_61, %c4] : memref<8x328xf32, #tpu.memory_space<vmem>>, vector<8x252xf32>
    %c32_62 = arith.constant 32 : index
    %c0_63 = arith.constant 0 : index
    %59 = vector.load %arg6[%c32_62, %c0_63] : memref<200x252xf32, #tpu.memory_space<vmem>>, vector<8x252xf32>
    tpu.vector_store %arg6[%c32_62, %c0_63], %58 {strides = array<i32>} : memref<200x252xf32, #tpu.memory_space<vmem>>, vector<8x252xf32>,
    %c0_64 = arith.constant 0 : index
    %c18 = arith.constant 18 : index
    %60 = vector.load %arg5[%c0_64, %c18] : memref<8x328xf32, #tpu.memory_space<vmem>>, vector<8x252xf32>
    %c40 = arith.constant 40 : index
    %c0_65 = arith.constant 0 : index
    %61 = vector.load %arg6[%c40, %c0_65] : memref<200x252xf32, #tpu.memory_space<vmem>>, vector<8x252xf32>
    tpu.vector_store %arg6[%c40, %c0_65], %60 {strides = array<i32>} : memref<200x252xf32, #tpu.memory_space<vmem>>, vector<8x252xf32>,
    %c0_66 = arith.constant 0 : index
    %c19_67 = arith.constant 19 : index
    %62 = vector.load %arg5[%c0_66, %c19_67] : memref<8x328xf32, #tpu.memory_space<vmem>>, vector<8x252xf32>
    %c48_68 = arith.constant 48 : index
    %c0_69 = arith.constant 0 : index
    %63 = vector.load %arg6[%c48_68, %c0_69] : memref<200x252xf32, #tpu.memory_space<vmem>>, vector<8x252xf32>
    tpu.vector_store %arg6[%c48_68, %c0_69], %62 {strides = array<i32>} : memref<200x252xf32, #tpu.memory_space<vmem>>, vector<8x252xf32>,
    %c0_70 = arith.constant 0 : index
    %c20 = arith.constant 20 : index
    %64 = vector.load %arg5[%c0_70, %c20] : memref<8x328xf32, #tpu.memory_space<vmem>>, vector<8x252xf32>
    %c56 = arith.constant 56 : index
    %c0_71 = arith.constant 0 : index
    %65 = vector.load %arg6[%c56, %c0_71] : memref<200x252xf32, #tpu.memory_space<vmem>>, vector<8x252xf32>
    tpu.vector_store %arg6[%c56, %c0_71], %64 {strides = array<i32>} : memref<200x252xf32, #tpu.memory_space<vmem>>, vector<8x252xf32>,
    %c0_72 = arith.constant 0 : index
    %c21 = arith.constant 21 : index
    %66 = vector.load %arg5[%c0_72, %c21] : memref<8x328xf32, #tpu.memory_space<vmem>>, vector<8x252xf32>
    %c64_73 = arith.constant 64 : index
    %c0_74 = arith.constant 0 : index
    %67 = vector.load %arg6[%c64_73, %c0_74] : memref<200x252xf32, #tpu.memory_space<vmem>>, vector<8x252xf32>
    tpu.vector_store %arg6[%c64_73, %c0_74], %66 {strides = array<i32>} : memref<200x252xf32, #tpu.memory_space<vmem>>, vector<8x252xf32>,
    %c0_75 = arith.constant 0 : index
    %c22 = arith.constant 22 : index
    %68 = vector.load %arg5[%c0_75, %c22] : memref<8x328xf32, #tpu.memory_space<vmem>>, vector<8x252xf32>
    %c72 = arith.constant 72 : index
    %c0_76 = arith.constant 0 : index
    %69 = vector.load %arg6[%c72, %c0_76] : memref<200x252xf32, #tpu.memory_space<vmem>>, vector<8x252xf32>
    tpu.vector_store %arg6[%c72, %c0_76], %68 {strides = array<i32>} : memref<200x252xf32, #tpu.memory_space<vmem>>, vector<8x252xf32>,
    %c0_77 = arith.constant 0 : index
    %c36 = arith.constant 36 : index
    %70 = vector.load %arg5[%c0_77, %c36] : memref<8x328xf32, #tpu.memory_space<vmem>>, vector<8x252xf32>
    %c80_78 = arith.constant 80 : index
    %c0_79 = arith.constant 0 : index
    %71 = vector.load %arg6[%c80_78, %c0_79] : memref<200x252xf32, #tpu.memory_space<vmem>>, vector<8x252xf32>
    tpu.vector_store %arg6[%c80_78, %c0_79], %70 {strides = array<i32>} : memref<200x252xf32, #tpu.memory_space<vmem>>, vector<8x252xf32>,
    %c0_80 = arith.constant 0 : index
    %c37_81 = arith.constant 37 : index
    %72 = vector.load %arg5[%c0_80, %c37_81] : memref<8x328xf32, #tpu.memory_space<vmem>>, vector<8x252xf32>
    %c88 = arith.constant 88 : index
    %c0_82 = arith.constant 0 : index
    %73 = vector.load %arg6[%c88, %c0_82] : memref<200x252xf32, #tpu.memory_space<vmem>>, vector<8x252xf32>
    tpu.vector_store %arg6[%c88, %c0_82], %72 {strides = array<i32>} : memref<200x252xf32, #tpu.memory_space<vmem>>, vector<8x252xf32>,
    %c0_83 = arith.constant 0 : index
    %c38 = arith.constant 38 : index
    %74 = vector.load %arg5[%c0_83, %c38] : memref<8x328xf32, #tpu.memory_space<vmem>>, vector<8x252xf32>
    %c96_84 = arith.constant 96 : index
    %c0_85 = arith.constant 0 : index
    %75 = vector.load %arg6[%c96_84, %c0_85] : memref<200x252xf32, #tpu.memory_space<vmem>>, vector<8x252xf32>
    tpu.vector_store %arg6[%c96_84, %c0_85], %74 {strides = array<i32>} : memref<200x252xf32, #tpu.memory_space<vmem>>, vector<8x252xf32>,
    %c0_86 = arith.constant 0 : index
    %c39 = arith.constant 39 : index
    %76 = vector.load %arg5[%c0_86, %c39] : memref<8x328xf32, #tpu.memory_space<vmem>>, vector<8x252xf32>
    %c104 = arith.constant 104 : index
    %c0_87 = arith.constant 0 : index
    %77 = vector.load %arg6[%c104, %c0_87] : memref<200x252xf32, #tpu.memory_space<vmem>>, vector<8x252xf32>
    tpu.vector_store %arg6[%c104, %c0_87], %76 {strides = array<i32>} : memref<200x252xf32, #tpu.memory_space<vmem>>, vector<8x252xf32>,
    %c0_88 = arith.constant 0 : index
    %c40_89 = arith.constant 40 : index
    %78 = vector.load %arg5[%c0_88, %c40_89] : memref<8x328xf32, #tpu.memory_space<vmem>>, vector<8x252xf32>
    %c112_90 = arith.constant 112 : index
    %c0_91 = arith.constant 0 : index
    %79 = vector.load %arg6[%c112_90, %c0_91] : memref<200x252xf32, #tpu.memory_space<vmem>>, vector<8x252xf32>
    tpu.vector_store %arg6[%c112_90, %c0_91], %78 {strides = array<i32>} : memref<200x252xf32, #tpu.memory_space<vmem>>, vector<8x252xf32>,
    %c0_92 = arith.constant 0 : index
    %c54 = arith.constant 54 : index
    %80 = vector.load %arg5[%c0_92, %c54] : memref<8x328xf32, #tpu.memory_space<vmem>>, vector<8x252xf32>
    %c120 = arith.constant 120 : index
    %c0_93 = arith.constant 0 : index
    %81 = vector.load %arg6[%c120, %c0_93] : memref<200x252xf32, #tpu.memory_space<vmem>>, vector<8x252xf32>
    tpu.vector_store %arg6[%c120, %c0_93], %80 {strides = array<i32>} : memref<200x252xf32, #tpu.memory_space<vmem>>, vector<8x252xf32>,
    %c0_94 = arith.constant 0 : index
    %c55_95 = arith.constant 55 : index
    %82 = vector.load %arg5[%c0_94, %c55_95] : memref<8x328xf32, #tpu.memory_space<vmem>>, vector<8x252xf32>
    %c128_96 = arith.constant 128 : index
    %c0_97 = arith.constant 0 : index
    %83 = vector.load %arg6[%c128_96, %c0_97] : memref<200x252xf32, #tpu.memory_space<vmem>>, vector<8x252xf32>
    tpu.vector_store %arg6[%c128_96, %c0_97], %82 {strides = array<i32>} : memref<200x252xf32, #tpu.memory_space<vmem>>, vector<8x252xf32>,
    %c0_98 = arith.constant 0 : index
    %c56_99 = arith.constant 56 : index
    %84 = vector.load %arg5[%c0_98, %c56_99] : memref<8x328xf32, #tpu.memory_space<vmem>>, vector<8x252xf32>
    %c136 = arith.constant 136 : index
    %c0_100 = arith.constant 0 : index
    %85 = vector.load %arg6[%c136, %c0_100] : memref<200x252xf32, #tpu.memory_space<vmem>>, vector<8x252xf32>
    tpu.vector_store %arg6[%c136, %c0_100], %84 {strides = array<i32>} : memref<200x252xf32, #tpu.memory_space<vmem>>, vector<8x252xf32>,
    %c0_101 = arith.constant 0 : index
    %c57 = arith.constant 57 : index
    %86 = vector.load %arg5[%c0_101, %c57] : memref<8x328xf32, #tpu.memory_space<vmem>>, vector<8x252xf32>
    %c144_102 = arith.constant 144 : index
    %c0_103 = arith.constant 0 : index
    %87 = vector.load %arg6[%c144_102, %c0_103] : memref<200x252xf32, #tpu.memory_space<vmem>>, vector<8x252xf32>
    tpu.vector_store %arg6[%c144_102, %c0_103], %86 {strides = array<i32>} : memref<200x252xf32, #tpu.memory_space<vmem>>, vector<8x252xf32>,
    %c0_104 = arith.constant 0 : index
    %c58 = arith.constant 58 : index
    %88 = vector.load %arg5[%c0_104, %c58] : memref<8x328xf32, #tpu.memory_space<vmem>>, vector<8x252xf32>
    %c152 = arith.constant 152 : index
    %c0_105 = arith.constant 0 : index
    %89 = vector.load %arg6[%c152, %c0_105] : memref<200x252xf32, #tpu.memory_space<vmem>>, vector<8x252xf32>
    tpu.vector_store %arg6[%c152, %c0_105], %88 {strides = array<i32>} : memref<200x252xf32, #tpu.memory_space<vmem>>, vector<8x252xf32>,
    %c0_106 = arith.constant 0 : index
    %c72_107 = arith.constant 72 : index
    %90 = vector.load %arg5[%c0_106, %c72_107] : memref<8x328xf32, #tpu.memory_space<vmem>>, vector<8x252xf32>
    %c160_108 = arith.constant 160 : index
    %c0_109 = arith.constant 0 : index
    %91 = vector.load %arg6[%c160_108, %c0_109] : memref<200x252xf32, #tpu.memory_space<vmem>>, vector<8x252xf32>
    tpu.vector_store %arg6[%c160_108, %c0_109], %90 {strides = array<i32>} : memref<200x252xf32, #tpu.memory_space<vmem>>, vector<8x252xf32>,
    %c0_110 = arith.constant 0 : index
    %c73_111 = arith.constant 73 : index
    %92 = vector.load %arg5[%c0_110, %c73_111] : memref<8x328xf32, #tpu.memory_space<vmem>>, vector<8x252xf32>
    %c168 = arith.constant 168 : index
    %c0_112 = arith.constant 0 : index
    %93 = vector.load %arg6[%c168, %c0_112] : memref<200x252xf32, #tpu.memory_space<vmem>>, vector<8x252xf32>
    tpu.vector_store %arg6[%c168, %c0_112], %92 {strides = array<i32>} : memref<200x252xf32, #tpu.memory_space<vmem>>, vector<8x252xf32>,
    %c0_113 = arith.constant 0 : index
    %c74 = arith.constant 74 : index
    %94 = vector.load %arg5[%c0_113, %c74] : memref<8x328xf32, #tpu.memory_space<vmem>>, vector<8x252xf32>
    %c176_114 = arith.constant 176 : index
    %c0_115 = arith.constant 0 : index
    %95 = vector.load %arg6[%c176_114, %c0_115] : memref<200x252xf32, #tpu.memory_space<vmem>>, vector<8x252xf32>
    tpu.vector_store %arg6[%c176_114, %c0_115], %94 {strides = array<i32>} : memref<200x252xf32, #tpu.memory_space<vmem>>, vector<8x252xf32>,
    %c0_116 = arith.constant 0 : index
    %c75 = arith.constant 75 : index
    %96 = vector.load %arg5[%c0_116, %c75] : memref<8x328xf32, #tpu.memory_space<vmem>>, vector<8x252xf32>
    %c184 = arith.constant 184 : index
    %c0_117 = arith.constant 0 : index
    %97 = vector.load %arg6[%c184, %c0_117] : memref<200x252xf32, #tpu.memory_space<vmem>>, vector<8x252xf32>
    tpu.vector_store %arg6[%c184, %c0_117], %96 {strides = array<i32>} : memref<200x252xf32, #tpu.memory_space<vmem>>, vector<8x252xf32>,
    %c0_118 = arith.constant 0 : index
    %c76 = arith.constant 76 : index
    %98 = vector.load %arg5[%c0_118, %c76] : memref<8x328xf32, #tpu.memory_space<vmem>>, vector<8x252xf32>
    %c192_119 = arith.constant 192 : index
    %c0_120 = arith.constant 0 : index
    %99 = vector.load %arg6[%c192_119, %c0_120] : memref<200x252xf32, #tpu.memory_space<vmem>>, vector<8x252xf32>
    tpu.vector_store %arg6[%c192_119, %c0_120], %98 {strides = array<i32>} : memref<200x252xf32, #tpu.memory_space<vmem>>, vector<8x252xf32>,
    %c0_121 = arith.constant 0 : index
    %c0_122 = arith.constant 0 : index
    %100 = vector.load %arg2[%c0_121, %c0_122] : memref<16x200xf32, #tpu.memory_space<vmem>>, vector<16x200xf32>
    %c0_123 = arith.constant 0 : index
    %c0_124 = arith.constant 0 : index
    %101 = vector.load %arg6[%c0_123, %c0_124] : memref<200x252xf32, #tpu.memory_space<vmem>>, vector<200x252xf32>
    %cst_125 = arith.constant dense<0.000000e+00> : vector<16x252xf32>
    %102 = tpu.matmul %100, %101, %cst_125 {dimension_numbers = #tpu.dot_dimension_numbers<[1], [0], [0], [1], [0, 0, 1, 1], [], []>} : vector<16x200xf32>, vector<200x252xf32>, vector<16x252xf32> -> vector<16x252xf32>
    %c0_126 = arith.constant 0 : index
    %c0_127 = arith.constant 0 : index
    %103 = vector.load %arg3[%c0_126, %c0_127] : memref<16x1xf32, #tpu.memory_space<vmem>>, vector<16x1xf32>
    %104 = vector.broadcast %103 : vector<16x1xf32> to vector<16x252xf32>
    %105 = arith.addf %102, %104 : vector<16x252xf32>
    %cst_128 = arith.constant 0.000000e+00 : f32
    %106 = vector.broadcast %cst_128 : f32 to vector<16x252xf32>
    %107 = arith.cmpf ogt, %105, %106 : vector<16x252xf32>
    %cst_129 = arith.constant 2.000000e-01 : f32
    %108 = vector.broadcast %cst_129 : f32 to vector<16x252xf32>
    %109 = arith.mulf %105, %108 : vector<16x252xf32>
    %110 = arith.select %107, %105, %109 : vector<16x252xi1>, vector<16x252xf32>
    %111 = vector.extract_strided_slice %110 {offsets = [0, 0], sizes = [16, 14], strides = [1, 1]} : vector<16x252xf32> to vector<16x14xf32>
    %c0_130 = arith.constant 0 : index
    %c0_131 = arith.constant 0 : index
    %c0_132 = arith.constant 0 : index
    %112 = vector.load %arg4[%c0_130, %c0_131, %c0_132] : memref<1x16x196xf32, #tpu.memory_space<vmem>>, vector<1x16x14xf32>
    %113 = vector.shape_cast %112 : vector<1x16x14xf32> to vector<16x14xf32>
    %114 = vector.shape_cast %111 : vector<16x14xf32> to vector<1x16x14xf32>
    tpu.vector_store %arg4[%c0_130, %c0_131, %c0_132], %114 {strides = array<i32>} : memref<1x16x196xf32, #tpu.memory_space<vmem>>, vector<1x16x14xf32>,
    %115 = vector.extract_strided_slice %110 {offsets = [0, 18], sizes = [16, 14], strides = [1, 1]} : vector<16x252xf32> to vector<16x14xf32>
    %c0_133 = arith.constant 0 : index
    %c0_134 = arith.constant 0 : index
    %c14 = arith.constant 14 : index
    %116 = vector.load %arg4[%c0_133, %c0_134, %c14] : memref<1x16x196xf32, #tpu.memory_space<vmem>>, vector<1x16x14xf32>
    %117 = vector.shape_cast %116 : vector<1x16x14xf32> to vector<16x14xf32>
    %118 = vector.shape_cast %115 : vector<16x14xf32> to vector<1x16x14xf32>
    tpu.vector_store %arg4[%c0_133, %c0_134, %c14], %118 {strides = array<i32>} : memref<1x16x196xf32, #tpu.memory_space<vmem>>, vector<1x16x14xf32>,
    %119 = vector.extract_strided_slice %110 {offsets = [0, 36], sizes = [16, 14], strides = [1, 1]} : vector<16x252xf32> to vector<16x14xf32>
    %c0_135 = arith.constant 0 : index
    %c0_136 = arith.constant 0 : index
    %c28 = arith.constant 28 : index
    %120 = vector.load %arg4[%c0_135, %c0_136, %c28] : memref<1x16x196xf32, #tpu.memory_space<vmem>>, vector<1x16x14xf32>
    %121 = vector.shape_cast %120 : vector<1x16x14xf32> to vector<16x14xf32>
    %122 = vector.shape_cast %119 : vector<16x14xf32> to vector<1x16x14xf32>
    tpu.vector_store %arg4[%c0_135, %c0_136, %c28], %122 {strides = array<i32>} : memref<1x16x196xf32, #tpu.memory_space<vmem>>, vector<1x16x14xf32>,
    %123 = vector.extract_strided_slice %110 {offsets = [0, 54], sizes = [16, 14], strides = [1, 1]} : vector<16x252xf32> to vector<16x14xf32>
    %c0_137 = arith.constant 0 : index
    %c0_138 = arith.constant 0 : index
    %c42 = arith.constant 42 : index
    %124 = vector.load %arg4[%c0_137, %c0_138, %c42] : memref<1x16x196xf32, #tpu.memory_space<vmem>>, vector<1x16x14xf32>
    %125 = vector.shape_cast %124 : vector<1x16x14xf32> to vector<16x14xf32>
    %126 = vector.shape_cast %123 : vector<16x14xf32> to vector<1x16x14xf32>
    tpu.vector_store %arg4[%c0_137, %c0_138, %c42], %126 {strides = array<i32>} : memref<1x16x196xf32, #tpu.memory_space<vmem>>, vector<1x16x14xf32>,
    %127 = vector.extract_strided_slice %110 {offsets = [0, 72], sizes = [16, 14], strides = [1, 1]} : vector<16x252xf32> to vector<16x14xf32>
    %c0_139 = arith.constant 0 : index
    %c0_140 = arith.constant 0 : index
    %c56_141 = arith.constant 56 : index
    %128 = vector.load %arg4[%c0_139, %c0_140, %c56_141] : memref<1x16x196xf32, #tpu.memory_space<vmem>>, vector<1x16x14xf32>
    %129 = vector.shape_cast %128 : vector<1x16x14xf32> to vector<16x14xf32>
    %130 = vector.shape_cast %127 : vector<16x14xf32> to vector<1x16x14xf32>
    tpu.vector_store %arg4[%c0_139, %c0_140, %c56_141], %130 {strides = array<i32>} : memref<1x16x196xf32, #tpu.memory_space<vmem>>, vector<1x16x14xf32>,
    %131 = vector.extract_strided_slice %110 {offsets = [0, 90], sizes = [16, 14], strides = [1, 1]} : vector<16x252xf32> to vector<16x14xf32>
    %c0_142 = arith.constant 0 : index
    %c0_143 = arith.constant 0 : index
    %c70 = arith.constant 70 : index
    %132 = vector.load %arg4[%c0_142, %c0_143, %c70] : memref<1x16x196xf32, #tpu.memory_space<vmem>>, vector<1x16x14xf32>
    %133 = vector.shape_cast %132 : vector<1x16x14xf32> to vector<16x14xf32>
    %134 = vector.shape_cast %131 : vector<16x14xf32> to vector<1x16x14xf32>
    tpu.vector_store %arg4[%c0_142, %c0_143, %c70], %134 {strides = array<i32>} : memref<1x16x196xf32, #tpu.memory_space<vmem>>, vector<1x16x14xf32>,
    %135 = vector.extract_strided_slice %110 {offsets = [0, 108], sizes = [16, 14], strides = [1, 1]} : vector<16x252xf32> to vector<16x14xf32>
    %c0_144 = arith.constant 0 : index
    %c0_145 = arith.constant 0 : index
    %c84 = arith.constant 84 : index
    %136 = vector.load %arg4[%c0_144, %c0_145, %c84] : memref<1x16x196xf32, #tpu.memory_space<vmem>>, vector<1x16x14xf32>
    %137 = vector.shape_cast %136 : vector<1x16x14xf32> to vector<16x14xf32>
    %138 = vector.shape_cast %135 : vector<16x14xf32> to vector<1x16x14xf32>
    tpu.vector_store %arg4[%c0_144, %c0_145, %c84], %138 {strides = array<i32>} : memref<1x16x196xf32, #tpu.memory_space<vmem>>, vector<1x16x14xf32>,
    %139 = vector.extract_strided_slice %110 {offsets = [0, 126], sizes = [16, 14], strides = [1, 1]} : vector<16x252xf32> to vector<16x14xf32>
    %c0_146 = arith.constant 0 : index
    %c0_147 = arith.constant 0 : index
    %c98 = arith.constant 98 : index
    %140 = vector.load %arg4[%c0_146, %c0_147, %c98] : memref<1x16x196xf32, #tpu.memory_space<vmem>>, vector<1x16x14xf32>
    %141 = vector.shape_cast %140 : vector<1x16x14xf32> to vector<16x14xf32>
    %142 = vector.shape_cast %139 : vector<16x14xf32> to vector<1x16x14xf32>
    tpu.vector_store %arg4[%c0_146, %c0_147, %c98], %142 {strides = array<i32>} : memref<1x16x196xf32, #tpu.memory_space<vmem>>, vector<1x16x14xf32>,
    %143 = vector.extract_strided_slice %110 {offsets = [0, 144], sizes = [16, 14], strides = [1, 1]} : vector<16x252xf32> to vector<16x14xf32>
    %c0_148 = arith.constant 0 : index
    %c0_149 = arith.constant 0 : index
    %c112_150 = arith.constant 112 : index
    %144 = vector.load %arg4[%c0_148, %c0_149, %c112_150] : memref<1x16x196xf32, #tpu.memory_space<vmem>>, vector<1x16x14xf32>
    %145 = vector.shape_cast %144 : vector<1x16x14xf32> to vector<16x14xf32>
    %146 = vector.shape_cast %143 : vector<16x14xf32> to vector<1x16x14xf32>
    tpu.vector_store %arg4[%c0_148, %c0_149, %c112_150], %146 {strides = array<i32>} : memref<1x16x196xf32, #tpu.memory_space<vmem>>, vector<1x16x14xf32>,
    %147 = vector.extract_strided_slice %110 {offsets = [0, 162], sizes = [16, 14], strides = [1, 1]} : vector<16x252xf32> to vector<16x14xf32>
    %c0_151 = arith.constant 0 : index
    %c0_152 = arith.constant 0 : index
    %c126 = arith.constant 126 : index
    %148 = vector.load %arg4[%c0_151, %c0_152, %c126] : memref<1x16x196xf32, #tpu.memory_space<vmem>>, vector<1x16x14xf32>
    %149 = vector.shape_cast %148 : vector<1x16x14xf32> to vector<16x14xf32>
    %150 = vector.shape_cast %147 : vector<16x14xf32> to vector<1x16x14xf32>
    tpu.vector_store %arg4[%c0_151, %c0_152, %c126], %150 {strides = array<i32>} : memref<1x16x196xf32, #tpu.memory_space<vmem>>, vector<1x16x14xf32>,
    %151 = vector.extract_strided_slice %110 {offsets = [0, 180], sizes = [16, 14], strides = [1, 1]} : vector<16x252xf32> to vector<16x14xf32>
    %c0_153 = arith.constant 0 : index
    %c0_154 = arith.constant 0 : index
    %c140 = arith.constant 140 : index
    %152 = vector.load %arg4[%c0_153, %c0_154, %c140] : memref<1x16x196xf32, #tpu.memory_space<vmem>>, vector<1x16x14xf32>
    %153 = vector.shape_cast %152 : vector<1x16x14xf32> to vector<16x14xf32>
    %154 = vector.shape_cast %151 : vector<16x14xf32> to vector<1x16x14xf32>
    tpu.vector_store %arg4[%c0_153, %c0_154, %c140], %154 {strides = array<i32>} : memref<1x16x196xf32, #tpu.memory_space<vmem>>, vector<1x16x14xf32>,
    %155 = vector.extract_strided_slice %110 {offsets = [0, 198], sizes = [16, 14], strides = [1, 1]} : vector<16x252xf32> to vector<16x14xf32>
    %c0_155 = arith.constant 0 : index
    %c0_156 = arith.constant 0 : index
    %c154 = arith.constant 154 : index
    %156 = vector.load %arg4[%c0_155, %c0_156, %c154] : memref<1x16x196xf32, #tpu.memory_space<vmem>>, vector<1x16x14xf32>
    %157 = vector.shape_cast %156 : vector<1x16x14xf32> to vector<16x14xf32>
    %158 = vector.shape_cast %155 : vector<16x14xf32> to vector<1x16x14xf32>
    tpu.vector_store %arg4[%c0_155, %c0_156, %c154], %158 {strides = array<i32>} : memref<1x16x196xf32, #tpu.memory_space<vmem>>, vector<1x16x14xf32>,
    %159 = vector.extract_strided_slice %110 {offsets = [0, 216], sizes = [16, 14], strides = [1, 1]} : vector<16x252xf32> to vector<16x14xf32>
    %c0_157 = arith.constant 0 : index
    %c0_158 = arith.constant 0 : index
    %c168_159 = arith.constant 168 : index
    %160 = vector.load %arg4[%c0_157, %c0_158, %c168_159] : memref<1x16x196xf32, #tpu.memory_space<vmem>>, vector<1x16x14xf32>
    %161 = vector.shape_cast %160 : vector<1x16x14xf32> to vector<16x14xf32>
    %162 = vector.shape_cast %159 : vector<16x14xf32> to vector<1x16x14xf32>
    tpu.vector_store %arg4[%c0_157, %c0_158, %c168_159], %162 {strides = array<i32>} : memref<1x16x196xf32, #tpu.memory_space<vmem>>, vector<1x16x14xf32>,
    %163 = vector.extract_strided_slice %110 {offsets = [0, 234], sizes = [16, 14], strides = [1, 1]} : vector<16x252xf32> to vector<16x14xf32>
    %c0_160 = arith.constant 0 : index
    %c0_161 = arith.constant 0 : index
    %c182 = arith.constant 182 : index
    %164 = vector.load %arg4[%c0_160, %c0_161, %c182] : memref<1x16x196xf32, #tpu.memory_space<vmem>>, vector<1x16x14xf32>
    %165 = vector.shape_cast %164 : vector<1x16x14xf32> to vector<16x14xf32>
    %166 = vector.shape_cast %163 : vector<16x14xf32> to vector<1x16x14xf32>
    tpu.vector_store %arg4[%c0_160, %c0_161, %c182], %166 {strides = array<i32>} : memref<1x16x196xf32, #tpu.memory_space<vmem>>, vector<1x16x14xf32>,
    return
  }
  func.func @transform_0(%arg0: i32) -> (i32, i32, i32) {
    %c0_i32 = arith.constant 0 : i32
    %c0_i32_0 = arith.constant 0 : i32
    %c0_i32_1 = arith.constant 0 : i32
    return %arg0, %c0_i32, %c0_i32_0 : i32, i32, i32
  }
  func.func @transform_1(%arg0: i32) -> (i32, i32) {
    %c0_i32 = arith.constant 0 : i32
    %c0_i32_0 = arith.constant 0 : i32
    %c0_i32_1 = arith.constant 0 : i32
    return %c0_i32, %c0_i32_0 : i32, i32
  }
  func.func @transform_2(%arg0: i32) -> (i32, i32) {
    %c0_i32 = arith.constant 0 : i32
    %c0_i32_0 = arith.constant 0 : i32
    %c0_i32_1 = arith.constant 0 : i32
    return %c0_i32, %c0_i32_0 : i32, i32
  }
  func.func @transform_3(%arg0: i32) -> (i32, i32, i32) {
    %c0_i32 = arith.constant 0 : i32
    %c0_i32_0 = arith.constant 0 : i32
    %c0_i32_1 = arith.constant 0 : i32
    return %arg0, %c0_i32, %c0_i32_0 : i32, i32, i32
  }
}

</mosaic_0001>

<llo_original>
// kernel: conv_leaky_forward.1
$region0: #{conv_leaky_forward.1}
  #allocation0 [shape = 'u32[]', space=smem, size = 0x4, offset = 0x4, fixed_abs, tag = 'smem constant byte address 0x4 - core index']
  #allocation1 [shape = 'u32[72,128]{1,0:T(1,128)}', space=vmem, size = 0x9000, scoped, tag = 'internal scratch']
  #allocation2 [shape = 'f32[8,328]{1,0:T(8,128)}', space=vmem, size = 0x3000, scoped, tag = 'scratch operand']
  #allocation3 [shape = 'f32[200,252]{1,0:T(8,128)}', space=vmem, size = 0x32000, scoped, tag = 'scratch operand']
  %s0 = inlined_call_operand.vmem [shape: f32[2,8,256], index: 0, kind: input, shape index: {}]
  %s1 = inlined_call_operand.vmem [shape: f32[16,200], index: 1, kind: input, shape index: {}]
  %s2 = inlined_call_operand.vmem [shape: f32[16,1], index: 2, kind: input, shape index: {}]
  %s3 = inlined_call_operand.vmem [shape: f32[2,16,196], index: 3, kind: output, shape index: {}]
  %s4 = sld [smem:[#allocation0]]
  $region45: #{conv_leaky_forward.1} parent=0
    _
  %s6 = ssub.s32 1, %s4
  %s7 = scalar_select 0, %s6, %s4
  loop: start=0, step=1, limit=4
  $region2: #{conv_leaky_forward.1} parent=0 // loop_pre_header
    _
  $region3: #{conv_leaky_forward.1} parent=0 // loop_header
    %s9 = sphi 0, %s13
    %p10 = scmp.ge.s32.totalorder %s9, 4
    %s19 = sphi 0, %s21
    %s22 = sphi 0, %s19
    %s23 = sphi 0, %s22
    %s39 = sphi 0, %s23
    %s43 = sphi 0, %s43
    %s45 = sphi 0, %s43
    %s46 = sphi 0, %s45
    %s60 = sphi 0, %s46
    %s64 = sphi 0, %s64
    %s66 = sphi 0, %s64
    %s67 = sphi 0, %s66
    %s81 = sphi 0, %s67
    %s87 = sphi 0, %s89
    %s90 = sphi 0, %s87
    %s91 = sphi 0, %s90
    %s107 = sphi 0, %s91
  $region4: #{conv_leaky_forward.1} parent=0 // loop_header_branch
    %12 = sbr.rel (%p10) target = $region8
  $region5: #{conv_leaky_forward.1} parent=0 // loop_body
    %s14 = ssub.s32 %s9, 1
    %s15 = ssub.s32 %s9, 2
    %s16 = sadd.s32 %s9, 1
    %s17 = ssub.s32 %s9, %s16
    %p18 = scmp.eq.s32.totalorder %s17, 0
    %s20 = sadd.s32 %s19, 1
    %s21 = scalar_select %p18, %s19, %s20
    %p24 = pneg %p18
    %p25 = scmp.eq.s32.totalorder %s9, 1
    %p26 = por %p24, %p25
    %p27 = scmp.ne.s32.totalorder %s19, %s22
    %p28 = scmp.eq.s32.totalorder %s9, 0
    %p29 = por %p27, %p28
    %p30 = scmp.ne.s32.totalorder %s19, %s22
    %p31 = scmp.eq.s32.totalorder %s14, 1
    %p32 = por %p30, %p31
    %p33 = scmp.ne.s32.totalorder %s22, %s23
    %p34 = scmp.eq.s32.totalorder %s14, 0
    %p35 = por %p33, %p34
    %p36 = scmp.ne.s32.totalorder %s22, %s23
    %p37 = scmp.eq.s32.totalorder %s15, 1
    %p38 = por %p36, %p37
    %p40 = scmp.ne.s32.totalorder %s23, %s39
    %p41 = scmp.eq.s32.totalorder %s15, 0
    %p42 = por %p40, %p41
    %s44 = sadd.s32 %s43, 1
    %p47 = scmp.eq.s32.totalorder %s9, 1
    %p48 = scmp.ne.s32.totalorder %s43, %s45
    %p49 = scmp.eq.s32.totalorder %s9, 0
    %p50 = por %p48, %p49
    %p51 = scmp.ne.s32.totalorder %s43, %s45
    %p52 = scmp.eq.s32.totalorder %s14, 1
    %p53 = por %p51, %p52
    %p54 = scmp.ne.s32.totalorder %s45, %s46
    %p55 = scmp.eq.s32.totalorder %s14, 0
    %p56 = por %p54, %p55
    %p57 = scmp.ne.s32.totalorder %s45, %s46
    %p58 = scmp.eq.s32.totalorder %s15, 1
    %p59 = por %p57, %p58
    %p61 = scmp.ne.s32.totalorder %s46, %s60
    %p62 = scmp.eq.s32.totalorder %s15, 0
    %p63 = por %p61, %p62
    %s65 = sadd.s32 %s64, 1
    %p68 = scmp.eq.s32.totalorder %s9, 1
    %p69 = scmp.ne.s32.totalorder %s64, %s66
    %p70 = scmp.eq.s32.totalorder %s9, 0
    %p71 = por %p69, %p70
    %p72 = scmp.ne.s32.totalorder %s64, %s66
    %p73 = scmp.eq.s32.totalorder %s14, 1
    %p74 = por %p72, %p73
    %p75 = scmp.ne.s32.totalorder %s66, %s67
    %p76 = scmp.eq.s32.totalorder %s14, 0
    %p77 = por %p75, %p76
    %p78 = scmp.ne.s32.totalorder %s66, %s67
    %p79 = scmp.eq.s32.totalorder %s15, 1
    %p80 = por %p78, %p79
    %p82 = scmp.ne.s32.totalorder %s67, %s81
    %p83 = scmp.eq.s32.totalorder %s15, 0
    %p84 = por %p82, %p83
    %s85 = ssub.s32 %s9, %s16
    %p86 = scmp.eq.s32.totalorder %s85, 0
    %s88 = sadd.s32 %s87, 1
    %s89 = scalar_select %p86, %s87, %s88
    %p92 = pneg %p86
    %p93 = scmp.eq.s32.totalorder %s9, 1
    %p94 = por %p92, %p93
    %p95 = scmp.ne.s32.totalorder %s87, %s90
    %p96 = scmp.eq.s32.totalorder %s9, 0
    %p97 = por %p95, %p96
    %p98 = scmp.ne.s32.totalorder %s87, %s90
    %p99 = scmp.eq.s32.totalorder %s14, 1
    %p100 = por %p98, %p99
    %p101 = scmp.ne.s32.totalorder %s90, %s91
    %p102 = scmp.eq.s32.totalorder %s14, 0
    %p103 = por %p101, %p102
    %p104 = scmp.ne.s32.totalorder %s90, %s91
    %p105 = scmp.eq.s32.totalorder %s15, 1
    %p106 = por %p104, %p105
    %p108 = scmp.ne.s32.totalorder %s91, %s107
    %p109 = scmp.eq.s32.totalorder %s15, 0
    %p110 = por %p108, %p109
    %p111 = scmp.le.s32.totalorder 1, %s9
    %p112 = scmp.lt.s32.totalorder %s9, 3
    %p113 = pnand %p111, %p112
    %p114 = pneg %p113
    // Predicated region
    $region9: #{conv_leaky_forward.1} parent=5 // pred_check
      _
    $region10: #{conv_leaky_forward.1} parent=5 // pred_check_branch
      %116 = sbr.rel (%p113) target = $region12
    $region11: #{conv_leaky_forward.1} parent=5 // pred_region
      %s117 = ssub.s32 %s9, 1
      // Predicated region
      $region13: #{conv_leaky_forward.1} parent=11 // pred_check
        %p118 = pneg %p56
      $region14: #{conv_leaky_forward.1} parent=11 // pred_check_branch
        %120 = sbr.rel (%p118) target = $region16
      $region15: #{conv_leaky_forward.1} parent=11 // pred_region
        _
      $region16: #{conv_leaky_forward.1} parent=11 // pred_fallthru
        _
      // Predicated region
      $region17: #{conv_leaky_forward.1} parent=11 // pred_check
        %p121 = pneg %p77
      $region18: #{conv_leaky_forward.1} parent=11 // pred_check_branch
        %123 = sbr.rel (%p121) target = $region20
      $region19: #{conv_leaky_forward.1} parent=11 // pred_region
        _
      $region20: #{conv_leaky_forward.1} parent=11 // pred_fallthru
        _
    $region12: #{conv_leaky_forward.1} parent=5 // pred_fallthru
      _
    %p124 = scmp.lt.s32.totalorder %s9, 2
    // Predicated region
    $region21: #{conv_leaky_forward.1} parent=5 // pred_check
      %p125 = pneg %p124
    $region22: #{conv_leaky_forward.1} parent=5 // pred_check_branch
      %127 = sbr.rel (%p125) target = $region24
    $region23: #{conv_leaky_forward.1} parent=5 // pred_region
      // Predicated region
      $region25: #{conv_leaky_forward.1} parent=23 // pred_check
        %p128 = pneg %p29
      $region26: #{conv_leaky_forward.1} parent=23 // pred_check_branch
        %130 = sbr.rel (%p128) target = $region28
      $region27: #{conv_leaky_forward.1} parent=23 // pred_region
        %p131 = scmp.lt.s32.totalorder %s9, 1
        %s132 = scalar_select %p131, %s9, 1
        %s133 = smul.addr %s132, 2
        %s134 = smul.addr %s133, 8
        %s135 = scalar_lea.vmem %s0, %s134
      $region28: #{conv_leaky_forward.1} parent=23 // pred_fallthru
        _
    $region24: #{conv_leaky_forward.1} parent=5 // pred_fallthru
      _
    %p136 = scmp.le.s32.totalorder 1, %s9
    %p137 = scmp.lt.s32.totalorder %s9, 3
    %p138 = pnand %p136, %p137
    %p139 = pneg %p138
    // Predicated region
    $region29: #{conv_leaky_forward.1} parent=5 // pred_check
      _
    $region30: #{conv_leaky_forward.1} parent=5 // pred_check_branch
      %141 = sbr.rel (%p138) target = $region32
    $region31: #{conv_leaky_forward.1} parent=5 // pred_region
      %s142 = ssub.s32 %s9, 1
      %p143 = scmp.lt.s32.totalorder %s14, 1
      %s144 = scalar_select %p143, %s14, 1
      %s145 = smul.addr %s144, 2
      %s146 = smul.addr %s145, 8
      %s147 = scalar_lea.vmem %s0, %s146
      %p148 = pneg %p35
      %p149 = pneg %p32
      %p150 = pneg %p56
      %p151 = pneg %p53
      %p152 = pneg %p77
      %p153 = pneg %p74
      %p154 = pneg %p103
      %p155 = pneg %p100
      %p156 = scmp.lt.s32.totalorder %s14, 1
      %s157 = scalar_select %p156, %s14, 1
      %s158 = smul.addr %s157, 4
      %s159 = smul.addr %s158, 8
      %s160 = scalar_lea.vmem %s3, %s159
      %p161 = scmp.lt.s32.totalorder %s14, 1
      %s162 = scalar_select %p161, %s14, 1
      %s163 = smul.addr %s162, 2
      %s164 = smul.addr %s163, 8
      %s165 = scalar_lea.vmem %s0, %s164
      %p166 = scmp.lt.s32.totalorder %s14, 1
      %s167 = scalar_select %p166, %s14, 1
      %s168 = smul.addr %s167, 4
      %s169 = smul.addr %s168, 8
      %s170 = scalar_lea.vmem %s3, %s169
      %171 = vst [vmem:[#allocation2] sm:$0xff] 0.0
      %172 = vst [vmem:[#allocation2 + $0x8] sm:$0xff] 0.0
      %vm173 = vcmask 588800
      %174 = vst.msk [vmem:[#allocation2 + $0x10] sm:$0xff] %vm173, 0.0
      %v175 = vld [vmem:[%s165] sm:$0xff]
      %177 = vrot.lane.b32.xlu0 %v175, 19
      %v178 = vpop.permute.xlu0 %177
      %vm180 = vcmask 285848
      %181 = vst.msk [vmem:[#allocation2] sm:$0xff] %vm180, %v178
      %v182 = vld [vmem:[%s165] sm:$0xff]
      %184 = vrot.lane.b32.xlu0 %v182, 21
      %v185 = vpop.permute.xlu0 %184
      %vm187 = vcmask 433448
      %188 = vst.msk [vmem:[#allocation2] sm:$0xff] %vm187, %v185
      %v189 = vld [vmem:[%s165] sm:$0xff]
      %191 = vrot.lane.b32.xlu0 %v189, 23
      %v192 = vpop.permute.xlu0 %191
      %vm194 = vcmask 581048
      %195 = vst.msk [vmem:[#allocation2] sm:$0xff] %vm194, %v192
      %v196 = vld [vmem:[%s165] sm:$0xff]
      %198 = vrot.lane.b32.xlu0 %v196, 25
      %v199 = vpop.permute.xlu0 %198
      %vm201 = vcmask 728648
      %202 = vst.msk [vmem:[#allocation2] sm:$0xff] %vm201, %v199
      %v203 = vld [vmem:[%s165] sm:$0xff]
      %205 = vrot.lane.b32.xlu0 %v203, 27
      %v206 = vpop.permute.xlu0 %205
      %vm208 = vcmask 876248
      %209 = vst.msk [vmem:[#allocation2] sm:$0xff] %vm208, %v206
      %v210 = vld [vmem:[%s165] sm:$0xff]
      %212 = vrot.lane.b32.xlu0 %v210, 29
      %v213 = vpop.permute.xlu0 %212
      %vm215 = vcmask 1023848
      %216 = vst.msk [vmem:[#allocation2] sm:$0xff] %vm215, %v213
      %v217 = vld [vmem:[%s165] sm:$0xff]
      %219 = vrot.lane.b32.xlu0 %v217, 31
      %v220 = vpop.permute.xlu0 %219
      %vm222 = vcmask 1048568
      %223 = vst.msk [vmem:[#allocation2] sm:$0xff] %vm222, %v220
      %vm224 = vcmask 121856
      %225 = vst.msk [vmem:[#allocation2 + $0x8] sm:$0xff] %vm224, %v220
      %v226 = vld [vmem:[%s165] sm:$0xff]
      %228 = vrot.lane.b32.xlu0 %v226, 33
      %v229 = vpop.permute.xlu0 %228
      %vm231 = vcmask 269448
      %232 = vst.msk [vmem:[#allocation2 + $0x8] sm:$0xff] %vm231, %v229
      %v233 = vld [vmem:[%s165 + $0x8] sm:$0xff]
      %235 = vrot.lane.b32.xlu0 %v233, 35
      %v236 = vpop.permute.xlu0 %235
      %vm238 = vcmask 417048
      %239 = vst.msk [vmem:[#allocation2 + $0x8] sm:$0xff] %vm238, %v236
      %v240 = vld [vmem:[%s165 + $0x8] sm:$0xff]
      %242 = vrot.lane.b32.xlu0 %v240, 37
      %v243 = vpop.permute.xlu0 %242
      %vm245 = vcmask 564648
      %246 = vst.msk [vmem:[#allocation2 + $0x8] sm:$0xff] %vm245, %v243
      %v247 = vld [vmem:[%s165 + $0x8] sm:$0xff]
      %249 = vrot.lane.b32.xlu0 %v247, 39
      %v250 = vpop.permute.xlu0 %249
      %vm252 = vcmask 712248
      %253 = vst.msk [vmem:[#allocation2 + $0x8] sm:$0xff] %vm252, %v250
      %v254 = vld [vmem:[%s165 + $0x8] sm:$0xff]
      %256 = vrot.lane.b32.xlu0 %v254, 41
      %v257 = vpop.permute.xlu0 %256
      %vm259 = vcmask 859848
      %260 = vst.msk [vmem:[#allocation2 + $0x8] sm:$0xff] %vm259, %v257
      %v261 = vld [vmem:[%s165 + $0x8] sm:$0xff]
      %263 = vrot.lane.b32.xlu0 %v261, 43
      %v264 = vpop.permute.xlu0 %263
      %vm266 = vcmask 1007448
      %267 = vst.msk [vmem:[#allocation2 + $0x8] sm:$0xff] %vm266, %v264
      %v268 = vld [vmem:[%s165 + $0x8] sm:$0xff]
      %270 = vrot.lane.b32.xlu0 %v268, 45
      %v271 = vpop.permute.xlu0 %270
      %vm273 = vcmask 1048552
      %274 = vst.msk [vmem:[#allocation2 + $0x8] sm:$0xff] %vm273, %v271
      %vm275 = vcmask 105472
      %276 = vst.msk [vmem:[#allocation2 + $0x10] sm:$0xff] %vm275, %v271
      %v277 = vld [vmem:[%s165 + $0x8] sm:$0xff]
      %279 = vrot.lane.b32.xlu0 %v277, 47
      %v280 = vpop.permute.xlu0 %279
      %vm282 = vcmask 253048
      %283 = vst.msk [vmem:[#allocation2 + $0x10] sm:$0xff] %vm282, %v280
      %v284 = vld [vmem:[%s165 + $0x8] sm:$0xff]
      %286 = vrot.lane.b32.xlu0 %v284, 49
      %v287 = vpop.permute.xlu0 %286
      %vm289 = vcmask 400648
      %290 = vst.msk [vmem:[#allocation2 + $0x10] sm:$0xff] %vm289, %v287
      %v291 = vld [vmem:[#allocation2] sm:$0xff]
      %v292 = vld [vmem:[#allocation2 + $0x8] sm:$0xff]
      %293 = vst [vmem:[#allocation3] sm:$0xff] %v291
      %vm294 = vcmask 1014784
      %295 = vst.msk [vmem:[#allocation3 + $0x8] sm:$0xff] %vm294, %v292
      %v296 = vld [vmem:[#allocation2] sm:$0xff]
      %v297 = vld [vmem:[#allocation2 + $0x8] sm:$0xff]
      %300 = vrot.lane.b32.xlu0 %v296, 127
      %v301 = vpop.permute.xlu0 %300
      %302 = vrot.lane.b32.xlu0 %v297, 127
      %v303 = vpop.permute.xlu0 %302
      %vm304 = vcmask 1039360
      %v305 = vsel %vm304, %v301, %v303
      %308 = vst [vmem:[#allocation3 + $0x10] sm:$0xff] %v305
      %309 = vst.msk [vmem:[#allocation3 + $0x18] sm:$0xff] %vm294, %v303
      %v310 = vld [vmem:[#allocation2] sm:$0xff]
      %v311 = vld [vmem:[#allocation2 + $0x8] sm:$0xff]
      %314 = vrot.lane.b32.xlu0 %v310, 126
      %v315 = vpop.permute.xlu0 %314
      %316 = vrot.lane.b32.xlu0 %v311, 126
      %v317 = vpop.permute.xlu0 %316
      %vm318 = vcmask 1031168
      %v319 = vsel %vm318, %v315, %v317
      %322 = vst [vmem:[#allocation3 + $0x20] sm:$0xff] %v319
      %323 = vst.msk [vmem:[#allocation3 + $0x28] sm:$0xff] %vm294, %v317
      %v324 = vld [vmem:[#allocation2] sm:$0xff]
      %v325 = vld [vmem:[#allocation2 + $0x8] sm:$0xff]
      %328 = vrot.lane.b32.xlu0 %v324, 125
      %v329 = vpop.permute.xlu0 %328
      %330 = vrot.lane.b32.xlu0 %v325, 125
      %v331 = vpop.permute.xlu0 %330
      %vm332 = vcmask 1022976
      %v333 = vsel %vm332, %v329, %v331
      %336 = vst [vmem:[#allocation3 + $0x30] sm:$0xff] %v333
      %337 = vst.msk [vmem:[#allocation3 + $0x38] sm:$0xff] %vm294, %v331
      %v338 = vld [vmem:[#allocation2] sm:$0xff]
      %v339 = vld [vmem:[#allocation2 + $0x8] sm:$0xff]
      %342 = vrot.lane.b32.xlu0 %v338, 124
      %v343 = vpop.permute.xlu0 %342
      %344 = vrot.lane.b32.xlu0 %v339, 124
      %v345 = vpop.permute.xlu0 %344
      %v346 = vsel %vm294, %v343, %v345
      %349 = vst [vmem:[#allocation3 + $0x40] sm:$0xff] %v346
      %350 = vst.msk [vmem:[#allocation3 + $0x48] sm:$0xff] %vm294, %v345
      %v351 = vld [vmem:[#allocation2] sm:$0xff]
      %v352 = vld [vmem:[#allocation2 + $0x8] sm:$0xff]
      %v353 = vld [vmem:[#allocation2 + $0x10] sm:$0xff]
      %357 = vrot.lane.b32.xlu0 %v351, 110
      %v358 = vpop.permute.xlu0 %357
      %359 = vrot.lane.b32.xlu0 %v352, 110
      %v360 = vpop.permute.xlu0 %359
      %361 = vrot.lane.b32.xlu0 %v353, 110
      %v362 = vpop.permute.xlu0 %361
      %vm363 = vcmask 900096
      %v364 = vsel %vm363, %v358, %v360
      %v365 = vsel %vm363, %v360, %v362
      %368 = vst [vmem:[#allocation3 + $0x50] sm:$0xff] %v364
      %369 = vst.msk [vmem:[#allocation3 + $0x58] sm:$0xff] %vm294, %v365
      %v370 = vld [vmem:[#allocation2] sm:$0xff]
      %v371 = vld [vmem:[#allocation2 + $0x8] sm:$0xff]
      %v372 = vld [vmem:[#allocation2 + $0x10] sm:$0xff]
      %376 = vrot.lane.b32.xlu0 %v370, 109
      %v377 = vpop.permute.xlu0 %376
      %378 = vrot.lane.b32.xlu0 %v371, 109
      %v379 = vpop.permute.xlu0 %378
      %380 = vrot.lane.b32.xlu0 %v372, 109
      %v381 = vpop.permute.xlu0 %380
      %vm382 = vcmask 891904
      %v383 = vsel %vm382, %v377, %v379
      %v384 = vsel %vm382, %v379, %v381
      %387 = vst [vmem:[#allocation3 + $0x60] sm:$0xff] %v383
      %388 = vst.msk [vmem:[#allocation3 + $0x68] sm:$0xff] %vm294, %v384
      %v389 = vld [vmem:[#allocation2] sm:$0xff]
      %v390 = vld [vmem:[#allocation2 + $0x8] sm:$0xff]
      %v391 = vld [vmem:[#allocation2 + $0x10] sm:$0xff]
      %395 = vrot.lane.b32.xlu0 %v389, 108
      %v396 = vpop.permute.xlu0 %395
      %397 = vrot.lane.b32.xlu0 %v390, 108
      %v398 = vpop.permute.xlu0 %397
      %399 = vrot.lane.b32.xlu0 %v391, 108
      %v400 = vpop.permute.xlu0 %399
      %vm401 = vcmask 883712
      %v402 = vsel %vm401, %v396, %v398
      %v403 = vsel %vm401, %v398, %v400
      %406 = vst [vmem:[#allocation3 + $0x70] sm:$0xff] %v402
      %407 = vst.msk [vmem:[#allocation3 + $0x78] sm:$0xff] %vm294, %v403
      %v408 = vld [vmem:[#allocation2] sm:$0xff]
      %v409 = vld [vmem:[#allocation2 + $0x8] sm:$0xff]
      %v410 = vld [vmem:[#allocation2 + $0x10] sm:$0xff]
      %414 = vrot.lane.b32.xlu0 %v408, 107
      %v415 = vpop.permute.xlu0 %414
      %416 = vrot.lane.b32.xlu0 %v409, 107
      %v417 = vpop.permute.xlu0 %416
      %418 = vrot.lane.b32.xlu0 %v410, 107
      %v419 = vpop.permute.xlu0 %418
      %vm420 = vcmask 875520
      %v421 = vsel %vm420, %v415, %v417
      %v422 = vsel %vm420, %v417, %v419
      %425 = vst [vmem:[#allocation3 + $0x80] sm:$0xff] %v421
      %426 = vst.msk [vmem:[#allocation3 + $0x88] sm:$0xff] %vm294, %v422
      %v427 = vld [vmem:[#allocation2] sm:$0xff]
      %v428 = vld [vmem:[#allocation2 + $0x8] sm:$0xff]
      %v429 = vld [vmem:[#allocation2 + $0x10] sm:$0xff]
      %433 = vrot.lane.b32.xlu0 %v427, 106
      %v434 = vpop.permute.xlu0 %433
      %435 = vrot.lane.b32.xlu0 %v428, 106
      %v436 = vpop.permute.xlu0 %435
      %437 = vrot.lane.b32.xlu0 %v429, 106
      %v438 = vpop.permute.xlu0 %437
      %vm439 = vcmask 867328
      %v440 = vsel %vm439, %v434, %v436
      %v441 = vsel %vm439, %v436, %v438
      %444 = vst [vmem:[#allocation3 + $0x90] sm:$0xff] %v440
      %445 = vst.msk [vmem:[#allocation3 + $0x98] sm:$0xff] %vm294, %v441
      %v446 = vld [vmem:[#allocation2] sm:$0xff]
      %v447 = vld [vmem:[#allocation2 + $0x8] sm:$0xff]
      %v448 = vld [vmem:[#allocation2 + $0x10] sm:$0xff]
      %452 = vrot.lane.b32.xlu0 %v446, 92
      %v453 = vpop.permute.xlu0 %452
      %454 = vrot.lane.b32.xlu0 %v447, 92
      %v455 = vpop.permute.xlu0 %454
      %456 = vrot.lane.b32.xlu0 %v448, 92
      %v457 = vpop.permute.xlu0 %456
      %vm458 = vcmask 752640
      %v459 = vsel %vm458, %v453, %v455
      %v460 = vsel %vm458, %v455, %v457
      %463 = vst [vmem:[#allocation3 + $0xa0] sm:$0xff] %v459
      %464 = vst.msk [vmem:[#allocation3 + $0xa8] sm:$0xff] %vm294, %v460
      %v465 = vld [vmem:[#allocation2] sm:$0xff]
      %v466 = vld [vmem:[#allocation2 + $0x8] sm:$0xff]
      %v467 = vld [vmem:[#allocation2 + $0x10] sm:$0xff]
      %471 = vrot.lane.b32.xlu0 %v465, 91
      %v472 = vpop.permute.xlu0 %471
      %473 = vrot.lane.b32.xlu0 %v466, 91
      %v474 = vpop.permute.xlu0 %473
      %475 = vrot.lane.b32.xlu0 %v467, 91
      %v476 = vpop.permute.xlu0 %475
      %vm477 = vcmask 744448
      %v478 = vsel %vm477, %v472, %v474
      %v479 = vsel %vm477, %v474, %v476
      %482 = vst [vmem:[#allocation3 + $0xb0] sm:$0xff] %v478
      %483 = vst.msk [vmem:[#allocation3 + $0xb8] sm:$0xff] %vm294, %v479
      %v484 = vld [vmem:[#allocation2] sm:$0xff]
      %v485 = vld [vmem:[#allocation2 + $0x8] sm:$0xff]
      %v486 = vld [vmem:[#allocation2 + $0x10] sm:$0xff]
      %490 = vrot.lane.b32.xlu0 %v484, 90
      %v491 = vpop.permute.xlu0 %490
      %492 = vrot.lane.b32.xlu0 %v485, 90
      %v493 = vpop.permute.xlu0 %492
      %494 = vrot.lane.b32.xlu0 %v486, 90
      %v495 = vpop.permute.xlu0 %494
      %vm496 = vcmask 736256
      %v497 = vsel %vm496, %v491, %v493
      %v498 = vsel %vm496, %v493, %v495
      %501 = vst [vmem:[#allocation3 + $0xc0] sm:$0xff] %v497
      %502 = vst.msk [vmem:[#allocation3 + $0xc8] sm:$0xff] %vm294, %v498
      %v503 = vld [vmem:[#allocation2] sm:$0xff]
      %v504 = vld [vmem:[#allocation2 + $0x8] sm:$0xff]
      %v505 = vld [vmem:[#allocation2 + $0x10] sm:$0xff]
      %509 = vrot.lane.b32.xlu0 %v503, 89
      %v510 = vpop.permute.xlu0 %509
      %511 = vrot.lane.b32.xlu0 %v504, 89
      %v512 = vpop.permute.xlu0 %511
      %513 = vrot.lane.b32.xlu0 %v505, 89
      %v514 = vpop.permute.xlu0 %513
      %vm515 = vcmask 728064
      %v516 = vsel %vm515, %v510, %v512
      %v517 = vsel %vm515, %v512, %v514
      %520 = vst [vmem:[#allocation3 + $0xd0] sm:$0xff] %v516
      %521 = vst.msk [vmem:[#allocation3 + $0xd8] sm:$0xff] %vm294, %v517
      %v522 = vld [vmem:[#allocation2] sm:$0xff]
      %v523 = vld [vmem:[#allocation2 + $0x8] sm:$0xff]
      %v524 = vld [vmem:[#allocation2 + $0x10] sm:$0xff]
      %528 = vrot.lane.b32.xlu0 %v522, 88
      %v529 = vpop.permute.xlu0 %528
      %530 = vrot.lane.b32.xlu0 %v523, 88
      %v531 = vpop.permute.xlu0 %530
      %532 = vrot.lane.b32.xlu0 %v524, 88
      %v533 = vpop.permute.xlu0 %532
      %vm534 = vcmask 719872
      %v535 = vsel %vm534, %v529, %v531
      %v536 = vsel %vm534, %v531, %v533
      %539 = vst [vmem:[#allocation3 + $0xe0] sm:$0xff] %v535
      %540 = vst.msk [vmem:[#allocation3 + $0xe8] sm:$0xff] %vm294, %v536
      %v541 = vld [vmem:[#allocation2] sm:$0xff]
      %v542 = vld [vmem:[#allocation2 + $0x8] sm:$0xff]
      %v543 = vld [vmem:[#allocation2 + $0x10] sm:$0xff]
      %547 = vrot.lane.b32.xlu0 %v541, 74
      %v548 = vpop.permute.xlu0 %547
      %549 = vrot.lane.b32.xlu0 %v542, 74
      %v550 = vpop.permute.xlu0 %549
      %551 = vrot.lane.b32.xlu0 %v543, 74
      %v552 = vpop.permute.xlu0 %551
      %vm553 = vcmask 605184
      %v554 = vsel %vm553, %v548, %v550
      %v555 = vsel %vm553, %v550, %v552
      %558 = vst [vmem:[#allocation3 + $0xf0] sm:$0xff] %v554
      %559 = vst.msk [vmem:[#allocation3 + $0xf8] sm:$0xff] %vm294, %v555
      %v560 = vld [vmem:[#allocation2] sm:$0xff]
      %v561 = vld [vmem:[#allocation2 + $0x8] sm:$0xff]
      %v562 = vld [vmem:[#allocation2 + $0x10] sm:$0xff]
      %566 = vrot.lane.b32.xlu0 %v560, 73
      %v567 = vpop.permute.xlu0 %566
      %568 = vrot.lane.b32.xlu0 %v561, 73
      %v569 = vpop.permute.xlu0 %568
      %570 = vrot.lane.b32.xlu0 %v562, 73
      %v571 = vpop.permute.xlu0 %570
      %vm572 = vcmask 596992
      %v573 = vsel %vm572, %v567, %v569
      %v574 = vsel %vm572, %v569, %v571
      %577 = vst [vmem:[#allocation3 + $0x100] sm:$0xff] %v573
      %578 = vst.msk [vmem:[#allocation3 + $0x108] sm:$0xff] %vm294, %v574
      %v579 = vld [vmem:[#allocation2] sm:$0xff]
      %v580 = vld [vmem:[#allocation2 + $0x8] sm:$0xff]
      %v581 = vld [vmem:[#allocation2 + $0x10] sm:$0xff]
      %585 = vrot.lane.b32.xlu0 %v579, 72
      %v586 = vpop.permute.xlu0 %585
      %587 = vrot.lane.b32.xlu0 %v580, 72
      %v588 = vpop.permute.xlu0 %587
      %589 = vrot.lane.b32.xlu0 %v581, 72
      %v590 = vpop.permute.xlu0 %589
      %v591 = vsel %vm173, %v586, %v588
      %v592 = vsel %vm173, %v588, %v590
      %595 = vst [vmem:[#allocation3 + $0x110] sm:$0xff] %v591
      %596 = vst.msk [vmem:[#allocation3 + $0x118] sm:$0xff] %vm294, %v592
      %v597 = vld [vmem:[#allocation2] sm:$0xff]
      %v598 = vld [vmem:[#allocation2 + $0x8] sm:$0xff]
      %v599 = vld [vmem:[#allocation2 + $0x10] sm:$0xff]
      %603 = vrot.lane.b32.xlu0 %v597, 71
      %v604 = vpop.permute.xlu0 %603
      %605 = vrot.lane.b32.xlu0 %v598, 71
      %v606 = vpop.permute.xlu0 %605
      %607 = vrot.lane.b32.xlu0 %v599, 71
      %v608 = vpop.permute.xlu0 %607
      %vm609 = vcmask 580608
      %v610 = vsel %vm609, %v604, %v606
      %v611 = vsel %vm609, %v606, %v608
      %614 = vst [vmem:[#allocation3 + $0x120] sm:$0xff] %v610
      %615 = vst.msk [vmem:[#allocation3 + $0x128] sm:$0xff] %vm294, %v611
      %v616 = vld [vmem:[#allocation2] sm:$0xff]
      %v617 = vld [vmem:[#allocation2 + $0x8] sm:$0xff]
      %v618 = vld [vmem:[#allocation2 + $0x10] sm:$0xff]
      %622 = vrot.lane.b32.xlu0 %v616, 70
      %v623 = vpop.permute.xlu0 %622
      %624 = vrot.lane.b32.xlu0 %v617, 70
      %v625 = vpop.permute.xlu0 %624
      %626 = vrot.lane.b32.xlu0 %v618, 70
      %v627 = vpop.permute.xlu0 %626
      %vm628 = vcmask 572416
      %v629 = vsel %vm628, %v623, %v625
      %v630 = vsel %vm628, %v625, %v627
      %633 = vst [vmem:[#allocation3 + $0x130] sm:$0xff] %v629
      %634 = vst.msk [vmem:[#allocation3 + $0x138] sm:$0xff] %vm294, %v630
      %v635 = vld [vmem:[#allocation2] sm:$0xff]
      %v636 = vld [vmem:[#allocation2 + $0x8] sm:$0xff]
      %v637 = vld [vmem:[#allocation2 + $0x10] sm:$0xff]
      %641 = vrot.lane.b32.xlu0 %v635, 56
      %v642 = vpop.permute.xlu0 %641
      %643 = vrot.lane.b32.xlu0 %v636, 56
      %v644 = vpop.permute.xlu0 %643
      %645 = vrot.lane.b32.xlu0 %v637, 56
      %v646 = vpop.permute.xlu0 %645
      %vm647 = vcmask 457728
      %v648 = vsel %vm647, %v642, %v644
      %v649 = vsel %vm647, %v644, %v646
      %652 = vst [vmem:[#allocation3 + $0x140] sm:$0xff] %v648
      %653 = vst.msk [vmem:[#allocation3 + $0x148] sm:$0xff] %vm294, %v649
      %v654 = vld [vmem:[#allocation2] sm:$0xff]
      %v655 = vld [vmem:[#allocation2 + $0x8] sm:$0xff]
      %v656 = vld [vmem:[#allocation2 + $0x10] sm:$0xff]
      %660 = vrot.lane.b32.xlu0 %v654, 55
      %v661 = vpop.permute.xlu0 %660
      %662 = vrot.lane.b32.xlu0 %v655, 55
      %v663 = vpop.permute.xlu0 %662
      %664 = vrot.lane.b32.xlu0 %v656, 55
      %v665 = vpop.permute.xlu0 %664
      %vm666 = vcmask 449536
      %v667 = vsel %vm666, %v661, %v663
      %v668 = vsel %vm666, %v663, %v665
      %671 = vst [vmem:[#allocation3 + $0x150] sm:$0xff] %v667
      %672 = vst.msk [vmem:[#allocation3 + $0x158] sm:$0xff] %vm294, %v668
      %v673 = vld [vmem:[#allocation2] sm:$0xff]
      %v674 = vld [vmem:[#allocation2 + $0x8] sm:$0xff]
      %v675 = vld [vmem:[#allocation2 + $0x10] sm:$0xff]
      %679 = vrot.lane.b32.xlu0 %v673, 54
      %v680 = vpop.permute.xlu0 %679
      %681 = vrot.lane.b32.xlu0 %v674, 54
      %v682 = vpop.permute.xlu0 %681
      %683 = vrot.lane.b32.xlu0 %v675, 54
      %v684 = vpop.permute.xlu0 %683
      %vm685 = vcmask 441344
      %v686 = vsel %vm685, %v680, %v682
      %v687 = vsel %vm685, %v682, %v684
      %690 = vst [vmem:[#allocation3 + $0x160] sm:$0xff] %v686
      %691 = vst.msk [vmem:[#allocation3 + $0x168] sm:$0xff] %vm294, %v687
      %v692 = vld [vmem:[#allocation2] sm:$0xff]
      %v693 = vld [vmem:[#allocation2 + $0x8] sm:$0xff]
      %v694 = vld [vmem:[#allocation2 + $0x10] sm:$0xff]
      %698 = vrot.lane.b32.xlu0 %v692, 53
      %v699 = vpop.permute.xlu0 %698
      %700 = vrot.lane.b32.xlu0 %v693, 53
      %v701 = vpop.permute.xlu0 %700
      %702 = vrot.lane.b32.xlu0 %v694, 53
      %v703 = vpop.permute.xlu0 %702
      %vm704 = vcmask 433152
      %v705 = vsel %vm704, %v699, %v701
      %v706 = vsel %vm704, %v701, %v703
      %709 = vst [vmem:[#allocation3 + $0x170] sm:$0xff] %v705
      %710 = vst.msk [vmem:[#allocation3 + $0x178] sm:$0xff] %vm294, %v706
      %v711 = vld [vmem:[#allocation2] sm:$0xff]
      %v712 = vld [vmem:[#allocation2 + $0x8] sm:$0xff]
      %v713 = vld [vmem:[#allocation2 + $0x10] sm:$0xff]
      %717 = vrot.lane.b32.xlu0 %v711, 52
      %v718 = vpop.permute.xlu0 %717
      %719 = vrot.lane.b32.xlu0 %v712, 52
      %v720 = vpop.permute.xlu0 %719
      %721 = vrot.lane.b32.xlu0 %v713, 52
      %v722 = vpop.permute.xlu0 %721
      %vm723 = vcmask 424960
      %v724 = vsel %vm723, %v718, %v720
      %v725 = vsel %vm723, %v720, %v722
      %728 = vst [vmem:[#allocation3 + $0x180] sm:$0xff] %v724
      %729 = vst.msk [vmem:[#allocation3 + $0x188] sm:$0xff] %vm294, %v725
      %v730 = vld [vmem:[%s1] sm:$0xff]
      %v731 = vld [vmem:[%s1 + $0x8] sm:$0xff]
      %v732 = vld [vmem:[%s1 + $0x10] sm:$0xff]
      %v733 = vld [vmem:[%s1 + $0x18] sm:$0xff]
      %v734 = vld [vmem:[#allocation3] sm:$0xff]
      %v735 = vld [vmem:[#allocation3 + $0x8] sm:$0xff]
      %v736 = vld [vmem:[#allocation3 + $0x10] sm:$0xff]
      %v737 = vld [vmem:[#allocation3 + $0x18] sm:$0xff]
      %v738 = vld [vmem:[#allocation3 + $0x20] sm:$0xff]
      %v739 = vld [vmem:[#allocation3 + $0x28] sm:$0xff]
      %v740 = vld [vmem:[#allocation3 + $0x30] sm:$0xff]
      %v741 = vld [vmem:[#allocation3 + $0x38] sm:$0xff]
      %v742 = vld [vmem:[#allocation3 + $0x40] sm:$0xff]
      %v743 = vld [vmem:[#allocation3 + $0x48] sm:$0xff]
      %v744 = vld [vmem:[#allocation3 + $0x50] sm:$0xff]
      %v745 = vld [vmem:[#allocation3 + $0x58] sm:$0xff]
      %v746 = vld [vmem:[#allocation3 + $0x60] sm:$0xff]
      %v747 = vld [vmem:[#allocation3 + $0x68] sm:$0xff]
      %v748 = vld [vmem:[#allocation3 + $0x70] sm:$0xff]
      %v749 = vld [vmem:[#allocation3 + $0x78] sm:$0xff]
      %v750 = vld [vmem:[#allocation3 + $0x80] sm:$0xff]
      %v751 = vld [vmem:[#allocation3 + $0x88] sm:$0xff]
      %v752 = vld [vmem:[#allocation3 + $0x90] sm:$0xff]
      %v753 = vld [vmem:[#allocation3 + $0x98] sm:$0xff]
      %v754 = vld [vmem:[#allocation3 + $0xa0] sm:$0xff]
      %v755 = vld [vmem:[#allocation3 + $0xa8] sm:$0xff]
      %v756 = vld [vmem:[#allocation3 + $0xb0] sm:$0xff]
      %v757 = vld [vmem:[#allocation3 + $0xb8] sm:$0xff]
      %v758 = vld [vmem:[#allocation3 + $0xc0] sm:$0xff]
      %v759 = vld [vmem:[#allocation3 + $0xc8] sm:$0xff]
      %v760 = vld [vmem:[#allocation3 + $0xd0] sm:$0xff]
      %v761 = vld [vmem:[#allocation3 + $0xd8] sm:$0xff]
      %v762 = vld [vmem:[#allocation3 + $0xe0] sm:$0xff]
      %v763 = vld [vmem:[#allocation3 + $0xe8] sm:$0xff]
      %v764 = vld [vmem:[#allocation3 + $0xf0] sm:$0xff]
      %v765 = vld [vmem:[#allocation3 + $0xf8] sm:$0xff]
      %v766 = vld [vmem:[#allocation3 + $0x100] sm:$0xff]
      %v767 = vld [vmem:[#allocation3 + $0x108] sm:$0xff]
      %v768 = vld [vmem:[#allocation3 + $0x110] sm:$0xff]
      %v769 = vld [vmem:[#allocation3 + $0x118] sm:$0xff]
      %v770 = vld [vmem:[#allocation3 + $0x120] sm:$0xff]
      %v771 = vld [vmem:[#allocation3 + $0x128] sm:$0xff]
      %v772 = vld [vmem:[#allocation3 + $0x130] sm:$0xff]
      %v773 = vld [vmem:[#allocation3 + $0x138] sm:$0xff]
      %v774 = vld [vmem:[#allocation3 + $0x140] sm:$0xff]
      %v775 = vld [vmem:[#allocation3 + $0x148] sm:$0xff]
      %v776 = vld [vmem:[#allocation3 + $0x150] sm:$0xff]
      %v777 = vld [vmem:[#allocation3 + $0x158] sm:$0xff]
      %v778 = vld [vmem:[#allocation3 + $0x160] sm:$0xff]
      %v779 = vld [vmem:[#allocation3 + $0x168] sm:$0xff]
      %v780 = vld [vmem:[#allocation3 + $0x170] sm:$0xff]
      %v781 = vld [vmem:[#allocation3 + $0x178] sm:$0xff]
      %v782 = vld [vmem:[#allocation3 + $0x180] sm:$0xff]
      %v783 = vld [vmem:[#allocation3 + $0x188] sm:$0xff]
      %v784 = vld [vmem:[%s2] sm:$0xff]
      %v785 = vld [vmem:[%s2 + $0x8] sm:$0xff]
      %787 = vset.pattern.permute.xlu0 0
      %788 = vperm.xlu0 %787, %v784
      %v789 = vpop.permute.xlu0 %788
      %792 = vset.pattern.permute.xlu0 0
      %793 = vperm.xlu0 %792, %v785
      %v794 = vpop.permute.xlu0 %793
      %v797 = vsel %vm173, %v731, 0
      %v800 = vsel %vm173, %v733, 0
      %802 = vmatpush.msra.mxu0 %v764
      %803 = vmatpush.msra.mxu0 %v762
      %804 = vmatpush.msra.mxu0 %v760
      %805 = vmatpush.msra.mxu0 %v758
      %806 = vmatpush.msra.mxu0 %v756
      %807 = vmatpush.msra.mxu0 %v754
      %808 = vmatpush.msra.mxu0 %v752
      %809 = vmatpush.msra.mxu0 %v750
      %810 = vmatpush.msra.mxu0 %v748
      %811 = vmatpush.msra.mxu0 %v746
      %812 = vmatpush.msra.mxu0 %v744
      %813 = vmatpush.msra.mxu0 %v742
      %814 = vmatpush.msra.mxu0 %v740
      %815 = vmatpush.msra.mxu0 %v738
      %816 = vmatpush.msra.mxu0 %v736
      %817 = vmatpush.msra.mxu0 %v734
      %818 = vmatmul.f32.gmra.mxu0 %v730
      %v819 = vpop.f32.mrf.mxu0
      %v820 = vadd.f32 %v789, %v819
      %821 = vmatmul.f32.gmra.mxu0 %v732
      %v822 = vpop.f32.mrf.mxu0
      %v823 = vadd.f32 %v794, %v822
      %824 = vdwg.mxu0
      %825 = vmatpush.msra.mxu0 0.0
      %826 = vmatpush.msra.mxu0 0.0
      %827 = vmatpush.msra.mxu0 0.0
      %828 = vmatpush.msra.mxu0 0.0
      %829 = vmatpush.msra.mxu0 0.0
      %830 = vmatpush.msra.mxu0 0.0
      %831 = vmatpush.msra.mxu0 0.0
      %832 = vmatpush.msra.mxu0 %v782
      %833 = vmatpush.msra.mxu0 %v780
      %834 = vmatpush.msra.mxu0 %v778
      %835 = vmatpush.msra.mxu0 %v776
      %836 = vmatpush.msra.mxu0 %v774
      %837 = vmatpush.msra.mxu0 %v772
      %838 = vmatpush.msra.mxu0 %v770
      %839 = vmatpush.msra.mxu0 %v768
      %840 = vmatpush.msra.mxu0 %v766
      %841 = vmatmul.f32.gmra.mxu0 %v797
      %v842 = vpop.f32.mrf.mxu0
      %v843 = vadd.f32 %v820, %v842
      %844 = vmatmul.f32.gmra.mxu0 %v800
      %v845 = vpop.f32.mrf.mxu0
      %v846 = vadd.f32 %v823, %v845
      %847 = vdwg.mxu0
      %848 = vmatpush.msra.mxu0 %v765
      %849 = vmatpush.msra.mxu0 %v763
      %850 = vmatpush.msra.mxu0 %v761
      %851 = vmatpush.msra.mxu0 %v759
      %852 = vmatpush.msra.mxu0 %v757
      %853 = vmatpush.msra.mxu0 %v755
      %854 = vmatpush.msra.mxu0 %v753
      %855 = vmatpush.msra.mxu0 %v751
      %856 = vmatpush.msra.mxu0 %v749
      %857 = vmatpush.msra.mxu0 %v747
      %858 = vmatpush.msra.mxu0 %v745
      %859 = vmatpush.msra.mxu0 %v743
      %860 = vmatpush.msra.mxu0 %v741
      %861 = vmatpush.msra.mxu0 %v739
      %862 = vmatpush.msra.mxu0 %v737
      %863 = vmatpush.msra.mxu0 %v735
      %864 = vmatmul.f32.gmra.mxu0 %v730
      %v865 = vpop.f32.mrf.mxu0
      %v866 = vadd.f32 %v789, %v865
      %867 = vmatmul.f32.gmra.mxu0 %v732
      %v868 = vpop.f32.mrf.mxu0
      %v869 = vadd.f32 %v794, %v868
      %870 = vdwg.mxu0
      %871 = vmatpush.msra.mxu0 0.0
      %872 = vmatpush.msra.mxu0 0.0
      %873 = vmatpush.msra.mxu0 0.0
      %874 = vmatpush.msra.mxu0 0.0
      %875 = vmatpush.msra.mxu0 0.0
      %876 = vmatpush.msra.mxu0 0.0
      %877 = vmatpush.msra.mxu0 0.0
      %878 = vmatpush.msra.mxu0 %v783
      %879 = vmatpush.msra.mxu0 %v781
      %880 = vmatpush.msra.mxu0 %v779
      %881 = vmatpush.msra.mxu0 %v777
      %882 = vmatpush.msra.mxu0 %v775
      %883 = vmatpush.msra.mxu0 %v773
      %884 = vmatpush.msra.mxu0 %v771
      %885 = vmatpush.msra.mxu0 %v769
      %886 = vmatpush.msra.mxu0 %v767
      %887 = vmatmul.f32.gmra.mxu0 %v797
      %v888 = vpop.f32.mrf.mxu0
      %v889 = vadd.f32 %v866, %v888
      %890 = vmatmul.f32.gmra.mxu0 %v800
      %v891 = vpop.f32.mrf.mxu0
      %v892 = vadd.f32 %v869, %v891
      %893 = vdwg.mxu0
      %vm894 = vcmp.gt.f32.partialorder %v843, 0.0
      %vm895 = vcmp.gt.f32.partialorder %v889, 0.0
      %vm896 = vcmp.gt.f32.partialorder %v846, 0.0
      %vm897 = vcmp.gt.f32.partialorder %v892, 0.0
      %v898 = vmul.f32 %v843, 0.2
      %v899 = vmul.f32 %v889, 0.2
      %v900 = vmul.f32 %v846, 0.2
      %v901 = vmul.f32 %v892, 0.2
      %v902 = vsel %vm894, %v843, %v898
      %v903 = vsel %vm895, %v889, %v899
      %v904 = vsel %vm896, %v846, %v900
      %v905 = vsel %vm897, %v892, %v901
      %vm906 = vcmask 113664
      %907 = vst.msk [vmem:[%s170] sm:$0xff] %vm906, %v902
      %908 = vst.msk [vmem:[%s170 + $0x10] sm:$0xff] %vm906, %v904
      %911 = vrot.lane.b32.xlu0 %v902, 124
      %v912 = vpop.permute.xlu0 %911
      %913 = vrot.lane.b32.xlu0 %v904, 124
      %v914 = vpop.permute.xlu0 %913
      %vm917 = vcmask 228464
      %918 = vst.msk [vmem:[%s170] sm:$0xff] %vm917, %v912
      %919 = vst.msk [vmem:[%s170 + $0x10] sm:$0xff] %vm917, %v914
      %920 = vrot.lane.b32.xlu0 %v902, 120
      %v921 = vpop.permute.xlu0 %920
      %922 = vrot.lane.b32.xlu0 %v904, 120
      %v923 = vpop.permute.xlu0 %922
      %vm926 = vcmask 343264
      %927 = vst.msk [vmem:[%s170] sm:$0xff] %vm926, %v921
      %928 = vst.msk [vmem:[%s170 + $0x10] sm:$0xff] %vm926, %v923
      %929 = vrot.lane.b32.xlu0 %v902, 116
      %v930 = vpop.permute.xlu0 %929
      %931 = vrot.lane.b32.xlu0 %v904, 116
      %v932 = vpop.permute.xlu0 %931
      %vm935 = vcmask 458064
      %936 = vst.msk [vmem:[%s170] sm:$0xff] %vm935, %v930
      %937 = vst.msk [vmem:[%s170 + $0x10] sm:$0xff] %vm935, %v932
      %938 = vrot.lane.b32.xlu0 %v902, 112
      %v939 = vpop.permute.xlu0 %938
      %940 = vrot.lane.b32.xlu0 %v904, 112
      %v941 = vpop.permute.xlu0 %940
      %vm944 = vcmask 572864
      %945 = vst.msk [vmem:[%s170] sm:$0xff] %vm944, %v939
      %946 = vst.msk [vmem:[%s170 + $0x10] sm:$0xff] %vm944, %v941
      %947 = vrot.lane.b32.xlu0 %v902, 108
      %v948 = vpop.permute.xlu0 %947
      %949 = vrot.lane.b32.xlu0 %v904, 108
      %v950 = vpop.permute.xlu0 %949
      %vm953 = vcmask 687664
      %954 = vst.msk [vmem:[%s170] sm:$0xff] %vm953, %v948
      %955 = vst.msk [vmem:[%s170 + $0x10] sm:$0xff] %vm953, %v950
      %956 = vrot.lane.b32.xlu0 %v902, 104
      %v957 = vpop.permute.xlu0 %956
      %958 = vrot.lane.b32.xlu0 %v904, 104
      %v959 = vpop.permute.xlu0 %958
      %vm962 = vcmask 802464
      %963 = vst.msk [vmem:[%s170] sm:$0xff] %vm962, %v957
      %964 = vst.msk [vmem:[%s170 + $0x10] sm:$0xff] %vm962, %v959
      %967 = vrot.lane.b32.xlu0 %v902, 100
      %v968 = vpop.permute.xlu0 %967
      %969 = vrot.lane.b32.xlu0 %v903, 100
      %v970 = vpop.permute.xlu0 %969
      %971 = vrot.lane.b32.xlu0 %v904, 100
      %v972 = vpop.permute.xlu0 %971
      %973 = vrot.lane.b32.xlu0 %v905, 100
      %v974 = vpop.permute.xlu0 %973
      %vm975 = vcmask 818176
      %v976 = vsel %vm975, %v968, %v970
      %v977 = vsel %vm975, %v972, %v974
      %vm980 = vcmask 917264
      %981 = vst.msk [vmem:[%s170] sm:$0xff] %vm980, %v976
      %982 = vst.msk [vmem:[%s170 + $0x10] sm:$0xff] %vm980, %v977
      %983 = vrot.lane.b32.xlu0 %v903, 96
      %v984 = vpop.permute.xlu0 %983
      %985 = vrot.lane.b32.xlu0 %v905, 96
      %v986 = vpop.permute.xlu0 %985
      %vm989 = vcmask 1032064
      %990 = vst.msk [vmem:[%s170] sm:$0xff] %vm989, %v984
      %991 = vst.msk [vmem:[%s170 + $0x10] sm:$0xff] %vm989, %v986
      %992 = vrot.lane.b32.xlu0 %v903, 92
      %v993 = vpop.permute.xlu0 %992
      %994 = vrot.lane.b32.xlu0 %v905, 92
      %v995 = vpop.permute.xlu0 %994
      %vm998 = vcmask 1048560
      %999 = vst.msk [vmem:[%s170] sm:$0xff] %vm998, %v993
      %vm1000 = vcmask 97280
      %1001 = vst.msk [vmem:[%s170 + $0x8] sm:$0xff] %vm1000, %v993
      %1002 = vst.msk [vmem:[%s170 + $0x10] sm:$0xff] %vm998, %v995
      %1003 = vst.msk [vmem:[%s170 + $0x18] sm:$0xff] %vm1000, %v995
      %1004 = vrot.lane.b32.xlu0 %v903, 88
      %v1005 = vpop.permute.xlu0 %1004
      %1006 = vrot.lane.b32.xlu0 %v905, 88
      %v1007 = vpop.permute.xlu0 %1006
      %vm1010 = vcmask 212064
      %1011 = vst.msk [vmem:[%s170 + $0x8] sm:$0xff] %vm1010, %v1005
      %1012 = vst.msk [vmem:[%s170 + $0x18] sm:$0xff] %vm1010, %v1007
      %1013 = vrot.lane.b32.xlu0 %v903, 84
      %v1014 = vpop.permute.xlu0 %1013
      %1015 = vrot.lane.b32.xlu0 %v905, 84
      %v1016 = vpop.permute.xlu0 %1015
      %vm1019 = vcmask 326864
      %1020 = vst.msk [vmem:[%s170 + $0x8] sm:$0xff] %vm1019, %v1014
      %1021 = vst.msk [vmem:[%s170 + $0x18] sm:$0xff] %vm1019, %v1016
      %1022 = vrot.lane.b32.xlu0 %v903, 80
      %v1023 = vpop.permute.xlu0 %1022
      %1024 = vrot.lane.b32.xlu0 %v905, 80
      %v1025 = vpop.permute.xlu0 %1024
      %vm1028 = vcmask 441664
      %1029 = vst.msk [vmem:[%s170 + $0x8] sm:$0xff] %vm1028, %v1023
      %1030 = vst.msk [vmem:[%s170 + $0x18] sm:$0xff] %vm1028, %v1025
      %1031 = vrot.lane.b32.xlu0 %v903, 76
      %v1032 = vpop.permute.xlu0 %1031
      %1033 = vrot.lane.b32.xlu0 %v905, 76
      %v1034 = vpop.permute.xlu0 %1033
      %vm1037 = vcmask 556464
      %1038 = vst.msk [vmem:[%s170 + $0x8] sm:$0xff] %vm1037, %v1032
      %1039 = vst.msk [vmem:[%s170 + $0x18] sm:$0xff] %vm1037, %v1034
      %p1040 = scmp.lt.s32.totalorder %s14, 1
      %s1041 = scalar_select %p1040, %s14, 1
      %s1042 = smul.addr %s1041, 4
      %s1043 = smul.addr %s1042, 8
      %s1044 = scalar_lea.vmem %s3, %s1043
      // Predicated region
      $region33: #{conv_leaky_forward.1} parent=31 // pred_check
        %p1045 = pneg %p100
      $region34: #{conv_leaky_forward.1} parent=31 // pred_check_branch
        %1047 = sbr.rel (%p1045) target = $region36
      $region35: #{conv_leaky_forward.1} parent=31 // pred_region
        _
      $region36: #{conv_leaky_forward.1} parent=31 // pred_fallthru
        _
    $region32: #{conv_leaky_forward.1} parent=5 // pred_fallthru
      _
    %p1048 = scmp.le.s32.totalorder 2, %s9
    // Predicated region
    $region37: #{conv_leaky_forward.1} parent=5 // pred_check
      %p1049 = pneg %p1048
    $region38: #{conv_leaky_forward.1} parent=5 // pred_check_branch
      %1051 = sbr.rel (%p1049) target = $region40
    $region39: #{conv_leaky_forward.1} parent=5 // pred_region
      %s1052 = ssub.s32 %s9, 2
      // Predicated region
      $region41: #{conv_leaky_forward.1} parent=39 // pred_check
        %p1053 = pneg %p106
      $region42: #{conv_leaky_forward.1} parent=39 // pred_check_branch
        %1055 = sbr.rel (%p1053) target = $region44
      $region43: #{conv_leaky_forward.1} parent=39 // pred_region
        %p1056 = scmp.lt.s32.totalorder %s15, 1
        %s1057 = scalar_select %p1056, %s15, 1
        %s1058 = smul.addr %s1057, 4
        %s1059 = smul.addr %s1058, 8
        %s1060 = scalar_lea.vmem %s3, %s1059
      $region44: #{conv_leaky_forward.1} parent=39 // pred_fallthru
        _
    $region40: #{conv_leaky_forward.1} parent=5 // pred_fallthru
      _
  $region6: #{conv_leaky_forward.1} parent=0 // loop_footer
    %s13 = sadd.s32 1, %s9
  $region7: #{conv_leaky_forward.1} parent=0 // loop_footer_branch
    %8 = sbr.rel target = $region3
  $region8: #{conv_leaky_forward.1} parent=0 // loop_exit
    _

</llo_original>
